<compile_context>
chip_gen: v6e
topology: v6e:2x2x1
jax: 0.10.0
libtpu: 0.0.40
codegen_flags: <defaults>
</compile_context>

<pallas_src>
import jax
import jax.numpy as jnp
from jax.experimental import pallas as pl
from jax.experimental.pallas import tpu as pltpu


# --------------------------------------------------------------------------- #
# Pallas kernels: one (n, m_tile) slab per grid step.
#   big refs   : (1, C, K, bm)
#   small refs : (1, C, bm)      (precomputed sum_K of F2B)
# --------------------------------------------------------------------------- #
def _datanet_kernel(alpha_ref,
                    fxr_ref, fxi_ref,      # fftn(x)
                    fbr_ref, fbi_ref,      # FB
                    fbcr_ref, fbci_ref,    # FBC
                    fyr_ref, fyi_ref,      # FBFy
                    iwr_ref, iwi_ref,      # sum_K F2B (precomputed, small)
                    oxr_ref, oxi_ref):     # FX (output, pre-ifft)
    a = alpha_ref[pl.program_id(0)]        # per-N scalar alpha (SMEM)
    inv_a = 1.0 / a
    k_blocks = fxr_ref.shape[2]            # static K = sf0*sf1*sf2

    # FR = FBFy + fftn(alpha*x) = FBFy + alpha*fftn(x)   (FFT linearity)
    frr = fyr_ref[0] + a * fxr_ref[0]      # (C, K, bm)
    fri = fyi_ref[0] + a * fxi_ref[0]

    # x1 = FB * FR   (complex multiply)
    br = fbr_ref[0]
    bi = fbi_ref[0]
    x1r = br * frr - bi * fri
    x1i = br * fri + bi * frr

    # invWBR = mean_K(x1) / (mean_K(F2B) + alpha)
    #        = sum_K(x1)  / (sum_K(F2B) + K*alpha)       (1/K cancelled)
    sr = jnp.sum(x1r, axis=1)                            # (C, bm)
    si = jnp.sum(x1i, axis=1)
    dr = iwr_ref[0] + k_blocks * a
    di = iwi_ref[0]
    inv_den = 1.0 / (dr * dr + di * di)                  # one exact reciprocal
    wr = (sr * dr + si * di) * inv_den
    wi = (si * dr - sr * di) * inv_den

    # FCBinvWBR = FBC * repeat(invWBR)   -> broadcast over K in blocked layout
    cr = fbcr_ref[0]
    ci = fbci_ref[0]
    wrb = wr[:, None, :]
    wib = wi[:, None, :]
    tr = cr * wrb - ci * wib
    ti = cr * wib + ci * wrb

    # FX = (FR - FCBinvWBR) / alpha
    oxr_ref[0] = (frr - tr) * inv_a
    oxi_ref[0] = (fri - ti) * inv_a


def _datanet_conj_kernel(alpha_ref,
                         fxr_ref, fxi_ref,   # fftn(x)
                         fbr_ref, fbi_ref,   # FB
                         fyr_ref, fyi_ref,   # FBFy
                         iw_ref,             # sum_K |FB|^2 (real, small)
                         oxr_ref, oxi_ref):
    """Fast path assuming FBC = conj(FB) and F2B = |FB|^2 (real)."""
    a = alpha_ref[pl.program_id(0)]
    inv_a = 1.0 / a
    k_blocks = fxr_ref.shape[2]

    frr = fyr_ref[0] + a * fxr_ref[0]
    fri = fyi_ref[0] + a * fxi_ref[0]

    br = fbr_ref[0]
    bi = fbi_ref[0]
    x1r = br * frr - bi * fri
    x1i = br * fri + bi * frr

    sr = jnp.sum(x1r, axis=1)
    si = jnp.sum(x1i, axis=1)
    inv_den = 1.0 / (iw_ref[0] + k_blocks * a)           # real denominator
    wr = sr * inv_den
    wi = si * inv_den

    # FBC = conj(FB) = br - i*bi
    wrb = wr[:, None, :]
    wib = wi[:, None, :]
    tr = br * wrb + bi * wib
    ti = br * wib - bi * wrb

    oxr_ref[0] = (frr - tr) * inv_a
    oxi_ref[0] = (fri - ti) * inv_a


# --------------------------------------------------------------------------- #
# Layout plumbing (plain JAX): (N,C,T,H,W) <-> (N,C,K,M), lane axis = M.
# --------------------------------------------------------------------------- #
def _to_blocks(a, sf):
    N, C, T, H, W = a.shape
    sf0, sf1, sf2 = sf
    Ts, Hs, Ws = T // sf0, H // sf1, W // sf2
    a = a.reshape(N, C, sf0, Ts, sf1, Hs, sf2, Ws)
    a = a.transpose(0, 1, 2, 4, 6, 3, 5, 7)        # N,C,sf0,sf1,sf2,Ts,Hs,Ws
    return a.reshape(N, C, sf0 * sf1 * sf2, Ts * Hs * Ws)


def _from_blocks(a, sf, shape):
    N, C, T, H, W = shape
    sf0, sf1, sf2 = sf
    Ts, Hs, Ws = T // sf0, H // sf1, W // sf2
    a = a.reshape(N, C, sf0, sf1, sf2, Ts, Hs, Ws)
    a = a.transpose(0, 1, 2, 5, 3, 6, 4, 7)
    return a.reshape(N, C, T, H, W)


def _ri_blocks(z, sf, dtype=jnp.float32):
    return (_to_blocks(jnp.real(z).astype(dtype), sf),
            _to_blocks(jnp.imag(z).astype(dtype), sf))


def prepare_datanet3d_operands(FB, FBC, F2B, FBFy, sf, static_dtype=jnp.float32):
    """Re-block loop-invariant operands once (hoist out of the USRNet loop).

    Returns (fb_r, fb_i, fbc_r, fbc_i, fy_r, fy_i, iw_r, iw_i) where the first
    six are (N,C,K,M) planes and iw_* = sum over K of F2B, shaped (N,C,M)."""
    fb = _ri_blocks(FB, sf, static_dtype)
    fbc = _ri_blocks(FBC, sf, static_dtype)
    fy = _ri_blocks(FBFy, sf, static_dtype)
    f2b_r, f2b_i = _ri_blocks(F2B, sf, jnp.float32)
    iw_r = jnp.sum(f2b_r, axis=2).astype(static_dtype)
    iw_i = jnp.sum(f2b_i, axis=2).astype(static_dtype)
    return fb + fbc + fy + (iw_r, iw_i)


def prepare_datanet3d_operands_conj(FB, FBFy, sf, static_dtype=jnp.float32):
    """Fast-path operands assuming FBC = conj(FB), F2B = |FB|^2."""
    fb_r, fb_i = _ri_blocks(FB, sf, static_dtype)
    fy_r, fy_i = _ri_blocks(FBFy, sf, static_dtype)
    mag2 = (jnp.real(FB) ** 2 + jnp.imag(FB) ** 2).astype(jnp.float32)
    iw = jnp.sum(_to_blocks(mag2, sf), axis=2).astype(static_dtype)
    return fb_r, fb_i, fy_r, fy_i, iw


# --------------------------------------------------------------------------- #
# Tiling / VMEM sizing (generation-aware).
# --------------------------------------------------------------------------- #
def _physical_vmem_bytes():
    try:
        info = pltpu.get_tpu_info()
        cap = int(getattr(info, "vmem_capacity_bytes", 0) or 0)
    except Exception:
        cap = 0
    if cap <= 0:
        cap = 64 << 20      # most conservative (v7x per-TensorCore VMEM)
    return cap


def _pick_block_m(M, per_m_bytes, budget_bytes, min_steps=1):
    """Largest legal M-tile (multiple of 128, or M itself) within budget,
    with at least `min_steps` grid steps along M when possible."""
    if M <= 128:
        return M                                   # only legal block
    cap = max(128, (budget_bytes // max(per_m_bytes, 1)) // 128 * 128)
    if min_steps > 1:
        cap = min(cap, max(128, ((pl.cdiv(M, min_steps) + 127) // 128) * 128))
    elif M <= cap:
        return M                                   # single full-width step
    # Prefer a multiple-of-128 divisor of M (no partial tail block).
    bm = min(cap, (M // 128) * 128)
    while bm >= 128:
        if M % bm == 0:
            return bm
        bm -= 128
    return cap        # partial tail block; Pallas masks out-of-bounds writes


def _choose_tiling(M, C, K, N, n_big_planes, n_small_planes):
    phys = _physical_vmem_bytes()
    # Double-buffered f32 working set per unit of M (every plane pipelined x2).
    per_m = n_big_planes * 2 * C * K * 4 + n_small_planes * 2 * C * 4
    budget = phys // 2                             # headroom for compiler scratch
    min_steps = 2 if N == 1 else 1                 # keep v7x's 2nd TC busy
    bm = _pick_block_m(M, per_m, budget, min_steps)
    working_set = bm * per_m + (1 << 20)
    # Always set the limit explicitly (v5e default scoped limit is only 16 MiB),
    # and never above physical VMEM (v7x is 64 MiB per TensorCore).
    vmem_limit = int(min(working_set + (4 << 20), (phys * 7) // 8))
    return bm, vmem_limit


# --------------------------------------------------------------------------- #
# Forward (general path — exact DataNet3D contract)
# --------------------------------------------------------------------------- #
def datanet3d_forward_blocked(x, blocked_ops, alpha, sf):
    N, C, T, H, W = x.shape
    sf0, sf1, sf2 = sf
    K = sf0 * sf1 * sf2
    M = (T // sf0) * (H // sf1) * (W // sf2)

    # fft of x only; alpha is applied in-kernel (FFT linearity).
    Fx = jnp.fft.fftn(x.astype(jnp.float32), axes=(2, 3, 4))
    fxr, fxi = _ri_blocks(Fx, sf)
    alpha_n = alpha.reshape(N).astype(jnp.float32)

    bm, vmem_limit = _choose_tiling(M, C, K, N, n_big_planes=10, n_small_planes=2)
    grid = (N, pl.cdiv(M, bm))

    big = pl.BlockSpec((1, C, K, bm), lambda n, m: (n, 0, 0, m))
    small = pl.BlockSpec((1, C, bm), lambda n, m: (n, 0, m))
    smem = pl.BlockSpec(memory_space=pltpu.MemorySpace.SMEM)

    out_shape = (jax.ShapeDtypeStruct((N, C, K, M), jnp.float32),
                 jax.ShapeDtypeStruct((N, C, K, M), jnp.float32))
    n_elems = N * C * K * M
    cost = pl.CostEstimate(flops=26 * n_elems, transcendentals=0,
                           bytes_accessed=(10 * n_elems + 2 * N * C * M) * 4)

    fb_r, fb_i, fbc_r, fbc_i, fy_r, fy_i, iw_r, iw_i = blocked_ops
    oxr, oxi = pl.pallas_call(
        _datanet_kernel,
        out_shape=out_shape,
        grid=grid,
        in_specs=[smem] + [big] * 8 + [small] * 2,
        out_specs=(big, big),
        compiler_params=pltpu.CompilerParams(
            dimension_semantics=("parallel", "parallel"),
            vmem_limit_bytes=vmem_limit),
        cost_estimate=cost,
    )(alpha_n, fxr, fxi, fb_r, fb_i, fbc_r, fbc_i, fy_r, fy_i, iw_r, iw_i)

    FX = _from_blocks(oxr, sf, x.shape) + 1j * _from_blocks(oxi, sf, x.shape)
    Xest = jnp.real(jnp.fft.ifftn(FX, axes=(2, 3, 4)))
    return Xest.astype(jnp.float32)


def datanet3d_forward(x, FB, FBC, F2B, FBFy, alpha, sf):
    """Drop-in equivalent of DataNet3D.forward (alpha shaped (N,1,1,1,1))."""
    blocked = prepare_datanet3d_operands(FB, FBC, F2B, FBFy, sf)
    return datanet3d_forward_blocked(x, blocked, alpha, sf)


# --------------------------------------------------------------------------- #
# Forward (fast path: FBC = conj(FB), F2B = |FB|^2)
# --------------------------------------------------------------------------- #
def datanet3d_forward_conj_blocked(x, blocked_ops, alpha, sf):
    N, C, T, H, W = x.shape
    sf0, sf1, sf2 = sf
    K = sf0 * sf1 * sf2
    M = (T // sf0) * (H // sf1) * (W // sf2)

    Fx = jnp.fft.fftn(x.astype(jnp.float32), axes=(2, 3, 4))
    fxr, fxi = _ri_blocks(Fx, sf)
    alpha_n = alpha.reshape(N).astype(jnp.float32)

    bm, vmem_limit = _choose_tiling(M, C, K, N, n_big_planes=8, n_small_planes=1)
    grid = (N, pl.cdiv(M, bm))

    big = pl.BlockSpec((1, C, K, bm), lambda n, m: (n, 0, 0, m))
    small = pl.BlockSpec((1, C, bm), lambda n, m: (n, 0, m))
    smem = pl.BlockSpec(memory_space=pltpu.MemorySpace.SMEM)

    out_shape = (jax.ShapeDtypeStruct((N, C, K, M), jnp.float32),
                 jax.ShapeDtypeStruct((N, C, K, M), jnp.float32))
    n_elems = N * C * K * M
    cost = pl.CostEstimate(flops=24 * n_elems, transcendentals=0,
                           bytes_accessed=(8 * n_elems + N * C * M) * 4)

    fb_r, fb_i, fy_r, fy_i, iw = blocked_ops
    oxr, oxi = pl.pallas_call(
        _datanet_conj_kernel,
        out_shape=out_shape,
        grid=grid,
        in_specs=[smem] + [big] * 6 + [small],
        out_specs=(big, big),
        compiler_params=pltpu.CompilerParams(
            dimension_semantics=("parallel", "parallel"),
            vmem_limit_bytes=vmem_limit),
        cost_estimate=cost,
    )(alpha_n, fxr, fxi, fb_r, fb_i, fy_r, fy_i, iw)

    FX = _from_blocks(oxr, sf, x.shape) + 1j * _from_blocks(oxi, sf, x.shape)
    Xest = jnp.real(jnp.fft.ifftn(FX, axes=(2, 3, 4)))
    return Xest.astype(jnp.float32)


def datanet3d_forward_conj(x, FB, FBFy, alpha, sf):
    blocked = prepare_datanet3d_operands_conj(FB, FBFy, sf)
    return datanet3d_forward_conj_blocked(x, blocked, alpha, sf)


# --------------------------------------------------------------------------- #
# Pure-JAX reference (mirrors the torch code)
# --------------------------------------------------------------------------- #
def _splits3d_ref(a, sf):
    b = jnp.stack(jnp.split(a, sf[0], axis=2), axis=5)
    b = jnp.concatenate(jnp.split(b, sf[1], axis=3), axis=5)
    b = jnp.concatenate(jnp.split(b, sf[2], axis=4), axis=5)
    return b


def _ref_forward(x, FB, FBC, F2B, FBFy, alpha, sf):
    FR = FBFy + jnp.fft.fftn(alpha * x, axes=(2, 3, 4))
    x1 = FB * FR
    if sf == (1, 1, 1):
        FBR = jnp.squeeze(_splits3d_ref(x1, sf), axis=-1)
        invW = jnp.squeeze(_splits3d_ref(F2B, sf), axis=-1)
    else:
        FBR = jnp.mean(_splits3d_ref(x1, sf), axis=-1)
        invW = jnp.mean(_splits3d_ref(F2B, sf), axis=-1)
    invWBR = FBR / (invW + alpha)
    FCBinvWBR = FBC * jnp.tile(invWBR, (1, 1, sf[0], sf[1], sf[2]))
    FX = (FR - FCBinvWBR) / alpha
    return jnp.real(jnp.fft.ifftn(FX, axes=(2, 3, 4))).astype(jnp.float32)


if __name__ == "__main__":
    key = jax.random.PRNGKey(0)
    N, C, T, H, W = 2, 4, 8, 16, 16
    sf = (2, 2, 2)

    ks = jax.random.split(key, 6)
    x = jax.random.normal(ks[0], (N, C, T, H, W), jnp.float32)
    fb_r = jax.random.normal(ks[1], (N, C, T, H, W), jnp.float32)
    fb_i = jax.random.normal(ks[2], (N, C, T, H, W), jnp.float32)
    FB = (fb_r + 1j * fb_i).astype(jnp.complex64)
    FBC = jnp.conj(FB)
    F2B = (jnp.abs(FB) ** 2).astype(jnp.complex64)
    fy_r = jax.random.normal(ks[3], (N, C, T, H, W), jnp.float32)
    fy_i = jax.random.normal(ks[4], (N, C, T, H, W), jnp.float32)
    FBFy = (fy_r + 1j * fy_i).astype(jnp.complex64)
    alpha = jax.random.uniform(ks[5], (N, 1, 1, 1, 1), jnp.float32, 0.1, 1.0)

    ref = _ref_forward(x, FB, FBC, F2B, FBFy, alpha, sf)

    # General path (exact module contract).
    fwd = jax.jit(datanet3d_forward, static_argnames=("sf",))
    out = jax.block_until_ready(fwd(x, FB, FBC, F2B, FBFy, alpha, sf=sf))
    assert out.shape == (N, C, T, H, W), out.shape
    assert jnp.allclose(out, ref, rtol=2e-3, atol=2e-3), float(
        jnp.max(jnp.abs(out - ref)))

    # Fast path (assumes FBC = conj(FB), F2B = |FB|^2 — true for USRNet setups).
    fwd_conj = jax.jit(datanet3d_forward_conj, static_argnames=("sf",))
    out2 = jax.block_until_ready(fwd_conj(x, FB, FBFy, alpha, sf=sf))
    assert jnp.allclose(out2, ref, rtol=2e-3, atol=2e-3), float(
        jnp.max(jnp.abs(out2 - ref)))

    print("KERNEL_OK")
</pallas_src>

<mosaic_0001>
module attributes {stable_mosaic.version = 11 : i64} {
  func.func @_datanet_kernel(%arg0: i32, %arg1: i32, %arg2: memref<2xf32, #tpu.memory_space<smem>>, %arg3: memref<1x4x8x256xf32, #tpu.memory_space<vmem>>, %arg4: memref<1x4x8x256xf32, #tpu.memory_space<vmem>>, %arg5: memref<1x4x8x256xf32, #tpu.memory_space<vmem>>, %arg6: memref<1x4x8x256xf32, #tpu.memory_space<vmem>>, %arg7: memref<1x4x8x256xf32, #tpu.memory_space<vmem>>, %arg8: memref<1x4x8x256xf32, #tpu.memory_space<vmem>>, %arg9: memref<1x4x8x256xf32, #tpu.memory_space<vmem>>, %arg10: memref<1x4x8x256xf32, #tpu.memory_space<vmem>>, %arg11: memref<1x4x256xf32, #tpu.memory_space<vmem>>, %arg12: memref<1x4x256xf32, #tpu.memory_space<vmem>>, %arg13: memref<1x4x8x256xf32, #tpu.memory_space<vmem>>, %arg14: memref<1x4x8x256xf32, #tpu.memory_space<vmem>>) attributes {dimension_semantics = [#tpu.dimension_semantics<parallel>, #tpu.dimension_semantics<parallel>], iteration_bounds = array<i64: 2, 1>, scalar_prefetch = 0 : i64, scratch_operands = 0 : i64, tpu.core_type = #tpu.core_type<tc>, window_params = [{transform_indices = @transform_0, window_bounds = array<i64: 2>}, {transform_indices = @transform_1, window_bounds = array<i64: 1, 4, 8, 256>}, {transform_indices = @transform_2, window_bounds = array<i64: 1, 4, 8, 256>}, {transform_indices = @transform_3, window_bounds = array<i64: 1, 4, 8, 256>}, {transform_indices = @transform_4, window_bounds = array<i64: 1, 4, 8, 256>}, {transform_indices = @transform_5, window_bounds = array<i64: 1, 4, 8, 256>}, {transform_indices = @transform_6, window_bounds = array<i64: 1, 4, 8, 256>}, {transform_indices = @transform_7, window_bounds = array<i64: 1, 4, 8, 256>}, {transform_indices = @transform_8, window_bounds = array<i64: 1, 4, 8, 256>}, {transform_indices = @transform_9, window_bounds = array<i64: 1, 4, 256>}, {transform_indices = @transform_10, window_bounds = array<i64: 1, 4, 256>}, {transform_indices = @transform_11, window_bounds = array<i64: 1, 4, 8, 256>}, {transform_indices = @transform_12, window_bounds = array<i64: 1, 4, 8, 256>}]} {
    %0 = arith.index_cast %arg0 : i32 to index
    %1 = memref.load %arg2[%0] : memref<2xf32, #tpu.memory_space<smem>>
    %cst = arith.constant 1.000000e+00 : f32
    %2 = arith.divf %cst, %1 : f32
    %c0 = arith.constant 0 : index
    %c0_0 = arith.constant 0 : index
    %c0_1 = arith.constant 0 : index
    %c0_2 = arith.constant 0 : index
    %3 = vector.load %arg9[%c0, %c0_0, %c0_1, %c0_2] : memref<1x4x8x256xf32, #tpu.memory_space<vmem>>, vector<1x4x8x256xf32>
    %4 = vector.shape_cast %3 : vector<1x4x8x256xf32> to vector<4x8x256xf32>
    %c0_3 = arith.constant 0 : index
    %c0_4 = arith.constant 0 : index
    %c0_5 = arith.constant 0 : index
    %c0_6 = arith.constant 0 : index
    %5 = vector.load %arg3[%c0_3, %c0_4, %c0_5, %c0_6] : memref<1x4x8x256xf32, #tpu.memory_space<vmem>>, vector<1x4x8x256xf32>
    %6 = vector.shape_cast %5 : vector<1x4x8x256xf32> to vector<4x8x256xf32>
    %7 = vector.broadcast %1 : f32 to vector<4x8x256xf32>
    %8 = arith.mulf %7, %6 : vector<4x8x256xf32>
    %9 = arith.addf %4, %8 : vector<4x8x256xf32>
    %c0_7 = arith.constant 0 : index
    %c0_8 = arith.constant 0 : index
    %c0_9 = arith.constant 0 : index
    %c0_10 = arith.constant 0 : index
    %10 = vector.load %arg10[%c0_7, %c0_8, %c0_9, %c0_10] : memref<1x4x8x256xf32, #tpu.memory_space<vmem>>, vector<1x4x8x256xf32>
    %11 = vector.shape_cast %10 : vector<1x4x8x256xf32> to vector<4x8x256xf32>
    %c0_11 = arith.constant 0 : index
    %c0_12 = arith.constant 0 : index
    %c0_13 = arith.constant 0 : index
    %c0_14 = arith.constant 0 : index
    %12 = vector.load %arg4[%c0_11, %c0_12, %c0_13, %c0_14] : memref<1x4x8x256xf32, #tpu.memory_space<vmem>>, vector<1x4x8x256xf32>
    %13 = vector.shape_cast %12 : vector<1x4x8x256xf32> to vector<4x8x256xf32>
    %14 = vector.broadcast %1 : f32 to vector<4x8x256xf32>
    %15 = arith.mulf %14, %13 : vector<4x8x256xf32>
    %16 = arith.addf %11, %15 : vector<4x8x256xf32>
    %c0_15 = arith.constant 0 : index
    %c0_16 = arith.constant 0 : index
    %c0_17 = arith.constant 0 : index
    %c0_18 = arith.constant 0 : index
    %17 = vector.load %arg5[%c0_15, %c0_16, %c0_17, %c0_18] : memref<1x4x8x256xf32, #tpu.memory_space<vmem>>, vector<1x4x8x256xf32>
    %18 = vector.shape_cast %17 : vector<1x4x8x256xf32> to vector<4x8x256xf32>
    %c0_19 = arith.constant 0 : index
    %c0_20 = arith.constant 0 : index
    %c0_21 = arith.constant 0 : index
    %c0_22 = arith.constant 0 : index
    %19 = vector.load %arg6[%c0_19, %c0_20, %c0_21, %c0_22] : memref<1x4x8x256xf32, #tpu.memory_space<vmem>>, vector<1x4x8x256xf32>
    %20 = vector.shape_cast %19 : vector<1x4x8x256xf32> to vector<4x8x256xf32>
    %21 = arith.mulf %18, %9 : vector<4x8x256xf32>
    %22 = arith.mulf %20, %16 : vector<4x8x256xf32>
    %23 = arith.subf %21, %22 : vector<4x8x256xf32>
    %24 = arith.mulf %18, %16 : vector<4x8x256xf32>
    %25 = arith.mulf %20, %9 : vector<4x8x256xf32>
    %26 = arith.addf %24, %25 : vector<4x8x256xf32>
    %cst_23 = arith.constant dense<0.000000e+00> : vector<4x256xf32>
    %27 = vector.multi_reduction <add>, %23, %cst_23 [1] : vector<4x8x256xf32> to vector<4x256xf32>
    %cst_24 = arith.constant dense<0.000000e+00> : vector<4x256xf32>
    %28 = vector.multi_reduction <add>, %26, %cst_24 [1] : vector<4x8x256xf32> to vector<4x256xf32>
    %c0_25 = arith.constant 0 : index
    %c0_26 = arith.constant 0 : index
    %c0_27 = arith.constant 0 : index
    %29 = vector.load %arg11[%c0_25, %c0_26, %c0_27] : memref<1x4x256xf32, #tpu.memory_space<vmem>>, vector<1x4x256xf32>
    %30 = vector.shape_cast %29 : vector<1x4x256xf32> to vector<4x256xf32>
    %cst_28 = arith.constant 8.000000e+00 : f32
    %31 = arith.mulf %cst_28, %1 : f32
    %32 = vector.broadcast %31 : f32 to vector<4x256xf32>
    %33 = arith.addf %30, %32 : vector<4x256xf32>
    %c0_29 = arith.constant 0 : index
    %c0_30 = arith.constant 0 : index
    %c0_31 = arith.constant 0 : index
    %34 = vector.load %arg12[%c0_29, %c0_30, %c0_31] : memref<1x4x256xf32, #tpu.memory_space<vmem>>, vector<1x4x256xf32>
    %35 = vector.shape_cast %34 : vector<1x4x256xf32> to vector<4x256xf32>
    %36 = arith.mulf %33, %33 : vector<4x256xf32>
    %37 = arith.mulf %35, %35 : vector<4x256xf32>
    %38 = arith.addf %36, %37 : vector<4x256xf32>
    %cst_32 = arith.constant 1.000000e+00 : f32
    %39 = vector.broadcast %cst_32 : f32 to vector<4x256xf32>
    %40 = arith.divf %39, %38 : vector<4x256xf32>
    %41 = arith.mulf %27, %33 : vector<4x256xf32>
    %42 = arith.mulf %28, %35 : vector<4x256xf32>
    %43 = arith.addf %41, %42 : vector<4x256xf32>
    %44 = arith.mulf %43, %40 : vector<4x256xf32>
    %45 = arith.mulf %28, %33 : vector<4x256xf32>
    %46 = arith.mulf %27, %35 : vector<4x256xf32>
    %47 = arith.subf %45, %46 : vector<4x256xf32>
    %48 = arith.mulf %47, %40 : vector<4x256xf32>
    %c0_33 = arith.constant 0 : index
    %c0_34 = arith.constant 0 : index
    %c0_35 = arith.constant 0 : index
    %c0_36 = arith.constant 0 : index
    %49 = vector.load %arg7[%c0_33, %c0_34, %c0_35, %c0_36] : memref<1x4x8x256xf32, #tpu.memory_space<vmem>>, vector<1x4x8x256xf32>
    %50 = vector.shape_cast %49 : vector<1x4x8x256xf32> to vector<4x8x256xf32>
    %c0_37 = arith.constant 0 : index
    %c0_38 = arith.constant 0 : index
    %c0_39 = arith.constant 0 : index
    %c0_40 = arith.constant 0 : index
    %51 = vector.load %arg8[%c0_37, %c0_38, %c0_39, %c0_40] : memref<1x4x8x256xf32, #tpu.memory_space<vmem>>, vector<1x4x8x256xf32>
    %52 = vector.shape_cast %51 : vector<1x4x8x256xf32> to vector<4x8x256xf32>
    %53 = vector.shape_cast %44 : vector<4x256xf32> to vector<4x1x256xf32>
    %54 = vector.shape_cast %48 : vector<4x256xf32> to vector<4x1x256xf32>
    %55 = vector.broadcast %53 : vector<4x1x256xf32> to vector<4x8x256xf32>
    %56 = arith.mulf %50, %55 : vector<4x8x256xf32>
    %57 = vector.broadcast %54 : vector<4x1x256xf32> to vector<4x8x256xf32>
    %58 = arith.mulf %52, %57 : vector<4x8x256xf32>
    %59 = arith.subf %56, %58 : vector<4x8x256xf32>
    %60 = vector.broadcast %54 : vector<4x1x256xf32> to vector<4x8x256xf32>
    %61 = arith.mulf %50, %60 : vector<4x8x256xf32>
    %62 = vector.broadcast %53 : vector<4x1x256xf32> to vector<4x8x256xf32>
    %63 = arith.mulf %52, %62 : vector<4x8x256xf32>
    %64 = arith.addf %61, %63 : vector<4x8x256xf32>
    %65 = arith.subf %9, %59 : vector<4x8x256xf32>
    %66 = vector.broadcast %2 : f32 to vector<4x8x256xf32>
    %67 = arith.mulf %65, %66 : vector<4x8x256xf32>
    %c0_41 = arith.constant 0 : index
    %c0_42 = arith.constant 0 : index
    %c0_43 = arith.constant 0 : index
    %c0_44 = arith.constant 0 : index
    %68 = vector.load %arg13[%c0_41, %c0_42, %c0_43, %c0_44] : memref<1x4x8x256xf32, #tpu.memory_space<vmem>>, vector<1x4x8x256xf32>
    %69 = vector.shape_cast %68 : vector<1x4x8x256xf32> to vector<4x8x256xf32>
    %70 = vector.shape_cast %67 : vector<4x8x256xf32> to vector<1x4x8x256xf32>
    tpu.vector_store %arg13[%c0_41, %c0_42, %c0_43, %c0_44], %70 {strides = array<i32>} : memref<1x4x8x256xf32, #tpu.memory_space<vmem>>, vector<1x4x8x256xf32>,
    %71 = arith.subf %16, %64 : vector<4x8x256xf32>
    %72 = vector.broadcast %2 : f32 to vector<4x8x256xf32>
    %73 = arith.mulf %71, %72 : vector<4x8x256xf32>
    %c0_45 = arith.constant 0 : index
    %c0_46 = arith.constant 0 : index
    %c0_47 = arith.constant 0 : index
    %c0_48 = arith.constant 0 : index
    %74 = vector.load %arg14[%c0_45, %c0_46, %c0_47, %c0_48] : memref<1x4x8x256xf32, #tpu.memory_space<vmem>>, vector<1x4x8x256xf32>
    %75 = vector.shape_cast %74 : vector<1x4x8x256xf32> to vector<4x8x256xf32>
    %76 = vector.shape_cast %73 : vector<4x8x256xf32> to vector<1x4x8x256xf32>
    tpu.vector_store %arg14[%c0_45, %c0_46, %c0_47, %c0_48], %76 {strides = array<i32>} : memref<1x4x8x256xf32, #tpu.memory_space<vmem>>, vector<1x4x8x256xf32>,
    return
  }
  func.func @transform_0(%arg0: i32, %arg1: i32) -> i32 {
    %c0_i32 = arith.constant 0 : i32
    %c0_i32_0 = arith.constant 0 : i32
    return %c0_i32 : i32
  }
  func.func @transform_1(%arg0: i32, %arg1: i32) -> (i32, i32, i32, i32) {
    %c0_i32 = arith.constant 0 : i32
    %c0_i32_0 = arith.constant 0 : i32
    %c0_i32_1 = arith.constant 0 : i32
    return %arg0, %c0_i32, %c0_i32_0, %arg1 : i32, i32, i32, i32
  }
  func.func @transform_2(%arg0: i32, %arg1: i32) -> (i32, i32, i32, i32) {
    %c0_i32 = arith.constant 0 : i32
    %c0_i32_0 = arith.constant 0 : i32
    %c0_i32_1 = arith.constant 0 : i32
    return %arg0, %c0_i32, %c0_i32_0, %arg1 : i32, i32, i32, i32
  }
  func.func @transform_3(%arg0: i32, %arg1: i32) -> (i32, i32, i32, i32) {
    %c0_i32 = arith.constant 0 : i32
    %c0_i32_0 = arith.constant 0 : i32
    %c0_i32_1 = arith.constant 0 : i32
    return %arg0, %c0_i32, %c0_i32_0, %arg1 : i32, i32, i32, i32
  }
  func.func @transform_4(%arg0: i32, %arg1: i32) -> (i32, i32, i32, i32) {
    %c0_i32 = arith.constant 0 : i32
    %c0_i32_0 = arith.constant 0 : i32
    %c0_i32_1 = arith.constant 0 : i32
    return %arg0, %c0_i32, %c0_i32_0, %arg1 : i32, i32, i32, i32
  }
  func.func @transform_5(%arg0: i32, %arg1: i32) -> (i32, i32, i32, i32) {
    %c0_i32 = arith.constant 0 : i32
    %c0_i32_0 = arith.constant 0 : i32
    %c0_i32_1 = arith.constant 0 : i32
    return %arg0, %c0_i32, %c0_i32_0, %arg1 : i32, i32, i32, i32
  }
  func.func @transform_6(%arg0: i32, %arg1: i32) -> (i32, i32, i32, i32) {
    %c0_i32 = arith.constant 0 : i32
    %c0_i32_0 = arith.constant 0 : i32
    %c0_i32_1 = arith.constant 0 : i32
    return %arg0, %c0_i32, %c0_i32_0, %arg1 : i32, i32, i32, i32
  }
  func.func @transform_7(%arg0: i32, %arg1: i32) -> (i32, i32, i32, i32) {
    %c0_i32 = arith.constant 0 : i32
    %c0_i32_0 = arith.constant 0 : i32
    %c0_i32_1 = arith.constant 0 : i32
    return %arg0, %c0_i32, %c0_i32_0, %arg1 : i32, i32, i32, i32
  }
  func.func @transform_8(%arg0: i32, %arg1: i32) -> (i32, i32, i32, i32) {
    %c0_i32 = arith.constant 0 : i32
    %c0_i32_0 = arith.constant 0 : i32
    %c0_i32_1 = arith.constant 0 : i32
    return %arg0, %c0_i32, %c0_i32_0, %arg1 : i32, i32, i32, i32
  }
  func.func @transform_9(%arg0: i32, %arg1: i32) -> (i32, i32, i32) {
    %c0_i32 = arith.constant 0 : i32
    %c0_i32_0 = arith.constant 0 : i32
    return %arg0, %c0_i32, %arg1 : i32, i32, i32
  }
  func.func @transform_10(%arg0: i32, %arg1: i32) -> (i32, i32, i32) {
    %c0_i32 = arith.constant 0 : i32
    %c0_i32_0 = arith.constant 0 : i32
    return %arg0, %c0_i32, %arg1 : i32, i32, i32
  }
  func.func @transform_11(%arg0: i32, %arg1: i32) -> (i32, i32, i32, i32) {
    %c0_i32 = arith.constant 0 : i32
    %c0_i32_0 = arith.constant 0 : i32
    %c0_i32_1 = arith.constant 0 : i32
    return %arg0, %c0_i32, %c0_i32_0, %arg1 : i32, i32, i32, i32
  }
  func.func @transform_12(%arg0: i32, %arg1: i32) -> (i32, i32, i32, i32) {
    %c0_i32 = arith.constant 0 : i32
    %c0_i32_0 = arith.constant 0 : i32
    %c0_i32_1 = arith.constant 0 : i32
    return %arg0, %c0_i32, %c0_i32_0, %arg1 : i32, i32, i32, i32
  }
}

</mosaic_0001>

<llo_original>
// kernel: custom-call
$region0: #{custom-call}
  %s0 = inlined_call_operand.hbm [shape: c64[2,4,8,16,16], index: 0, kind: input, shape index: {}]
  %s1 = inlined_call_operand.vmem [shape: f32[2,4,8,16,16], index: 1, kind: output, shape index: {}]
  $region1: #{custom-call} parent=0
    #allocation0 [shape = 's32[1]{0}', space=sflag, size = 0x4, scoped, tag = 'scoped memory for custom-call']
    %2 = vsyncpa [#allocation0], 0
    %s3 = sshll.u32 %s1, 4
    %s4 = int_to_ptr.vmem [resolvable:$true] %s3
    %6 = dma.hbm_to_vmem [thread:$0]  %s0, 16384, %s4, [#allocation0]
    %7 = dma.done [#allocation0], 16384
    %8 = vsyncpa [#allocation0], 1

// kernel: custom-call.1
$region0: #{custom-call.1}
  %s0 = inlined_call_operand.hbm [shape: c64[2,4,8,16,16], index: 0, kind: input, shape index: {}]
  %s1 = inlined_call_operand.vmem [shape: f32[2,4,8,16,16], index: 1, kind: output, shape index: {}]
  %s2 = scalar_lea.hbm %s0, 16384
  $region1: #{custom-call.1} parent=0
    #allocation0 [shape = 's32[1]{0}', space=sflag, size = 0x4, scoped, tag = 'scoped memory for custom-call.1']
    %3 = vsyncpa [#allocation0], 0
    %s4 = sshll.u32 %s1, 4
    %s5 = int_to_ptr.vmem [resolvable:$true] %s4
    %7 = dma.hbm_to_vmem [thread:$0]  %s2, 16384, %s5, [#allocation0]
    %8 = dma.done [#allocation0], 16384
    %9 = vsyncpa [#allocation0], 1

// kernel: datanet3d_forward.1
$region0: #{datanet3d_forward.1}
  #allocation0 [shape = 'u32[]', space=smem, size = 0x4, offset = 0x4, fixed_abs, tag = 'smem constant byte address 0x4 - core index']
  #allocation1 [shape = 'u32[144,128]{1,0:T(1,128)}', space=vmem, size = 0x12000, scoped, tag = 'internal scratch']
  %s0 = inlined_call_operand.vmem [shape: f32[2], index: 0, kind: input, shape index: {}]
  %s1 = inlined_call_operand.vmem [shape: f32[2,4,8,256], index: 1, kind: input, shape index: {}]
  %s2 = inlined_call_operand.vmem [shape: f32[2,4,8,256], index: 2, kind: input, shape index: {}]
  %s3 = inlined_call_operand.vmem [shape: f32[2,4,8,256], index: 3, kind: input, shape index: {}]
  %s4 = inlined_call_operand.vmem [shape: f32[2,4,8,256], index: 4, kind: input, shape index: {}]
  %s5 = inlined_call_operand.vmem [shape: f32[2,4,8,256], index: 5, kind: input, shape index: {}]
  %s6 = inlined_call_operand.vmem [shape: f32[2,4,8,256], index: 6, kind: input, shape index: {}]
  %s7 = inlined_call_operand.vmem [shape: f32[2,4,8,256], index: 7, kind: input, shape index: {}]
  %s8 = inlined_call_operand.vmem [shape: f32[2,4,8,256], index: 8, kind: input, shape index: {}]
  %s9 = inlined_call_operand.vmem [shape: f32[2,4,256], index: 9, kind: input, shape index: {}]
  %s10 = inlined_call_operand.vmem [shape: f32[2,4,256], index: 10, kind: input, shape index: {}]
  %s11 = inlined_call_operand.vmem [shape: f32[2,4,8,256], index: 11, kind: output, shape index: {0}]
  %s12 = inlined_call_operand.vmem [shape: f32[2,4,8,256], index: 12, kind: output, shape index: {1}]
  %13 = xla_tuple %s11, %s12
  %s14 = sld [smem:[#allocation0]]
  $region89: #{datanet3d_forward.1} parent=0
    _
  %s16 = ssub.s32 1, %s14
  %s17 = scalar_select 0, %s16, %s14
  $region1: #{datanet3d_forward.1} parent=0
    #allocation2 [shape = 'u8[512]{0}', space=smem, size = 0x200, scoped, tag = 'input window, operand 0, single buffered']
    #allocation3 [shape = 's32[2]{0}', space=sflag, size = 0x8, scoped, tag = 'scoped memory for datanet3d_forward.1']
    %18 = vsyncpa [#allocation3], 0
    loop: start=0, step=1, limit=4
    $region2: #{datanet3d_forward.1} parent=1 // loop_pre_header
      _
    $region3: #{datanet3d_forward.1} parent=1 // loop_header
      %s20 = sphi 0, %s24
      %p21 = scmp.ge.s32.totalorder %s20, 4
      %s27 = sphi 0, %s39
      %s28 = sphi 0, %s35
      %s29 = sphi 0, %s27
      %s30 = sphi 0, %s28
      %s31 = sphi 0, %s29
      %s32 = sphi 0, %s30
      %s40 = sphi 0, %s40
      %s42 = sphi 0, %s40
      %s43 = sphi 0, %s42
      %s57 = sphi 0, %s43
      %s65 = sphi 0, %s67
      %s68 = sphi 0, %s65
      %s69 = sphi 0, %s68
      %s85 = sphi 0, %s69
      %s93 = sphi 0, %s95
      %s96 = sphi 0, %s93
      %s97 = sphi 0, %s96
      %s113 = sphi 0, %s97
      %s121 = sphi 0, %s123
      %s124 = sphi 0, %s121
      %s125 = sphi 0, %s124
      %s141 = sphi 0, %s125
      %s149 = sphi 0, %s151
      %s152 = sphi 0, %s149
      %s153 = sphi 0, %s152
      %s169 = sphi 0, %s153
      %s177 = sphi 0, %s179
      %s180 = sphi 0, %s177
      %s181 = sphi 0, %s180
      %s197 = sphi 0, %s181
      %s205 = sphi 0, %s207
      %s208 = sphi 0, %s205
      %s209 = sphi 0, %s208
      %s225 = sphi 0, %s209
      %s233 = sphi 0, %s235
      %s236 = sphi 0, %s233
      %s237 = sphi 0, %s236
      %s253 = sphi 0, %s237
      %s261 = sphi 0, %s263
      %s264 = sphi 0, %s261
      %s265 = sphi 0, %s264
      %s281 = sphi 0, %s265
      %s289 = sphi 0, %s291
      %s292 = sphi 0, %s289
      %s293 = sphi 0, %s292
      %s309 = sphi 0, %s293
      %s317 = sphi 0, %s319
      %s320 = sphi 0, %s317
      %s321 = sphi 0, %s320
      %s337 = sphi 0, %s321
      %s345 = sphi 0, %s347
      %s348 = sphi 0, %s345
      %s349 = sphi 0, %s348
      %s365 = sphi 0, %s349
      %s373 = sphi 0, %s375
      %s376 = sphi 0, %s373
      %s377 = sphi 0, %s376
      %s393 = sphi 0, %s377
    $region4: #{datanet3d_forward.1} parent=1 // loop_header_branch
      %23 = sbr.rel (%p21) target = $region8
    $region5: #{datanet3d_forward.1} parent=1 // loop_body
      %s25 = ssub.s32 %s20, 1
      %s26 = ssub.s32 %s20, 2
      %s33 = sadd.s32 1, %s28
      %p34 = scmp.ge.s32.totalorder %s33, 1
      %s35 = scalar_select %p34, 0, %s33
      %s36 = sadd.s32 1, %s27
      %s37 = scalar_select %p34, %s36, %s27
      %p38 = scmp.ge.s32.totalorder %s37, 2
      %s39 = scalar_select %p38, 0, %s37
      %s41 = sadd.s32 %s40, 1
      %p44 = scmp.eq.s32.totalorder %s20, 1
      %p45 = scmp.ne.s32.totalorder %s40, %s42
      %p46 = scmp.eq.s32.totalorder %s20, 0
      %p47 = por %p45, %p46
      %p48 = scmp.ne.s32.totalorder %s40, %s42
      %p49 = scmp.eq.s32.totalorder %s25, 1
      %p50 = por %p48, %p49
      %p51 = scmp.ne.s32.totalorder %s42, %s43
      %p52 = scmp.eq.s32.totalorder %s25, 0
      %p53 = por %p51, %p52
      %p54 = scmp.ne.s32.totalorder %s42, %s43
      %p55 = scmp.eq.s32.totalorder %s26, 1
      %p56 = por %p54, %p55
      %p58 = scmp.ne.s32.totalorder %s43, %s57
      %p59 = scmp.eq.s32.totalorder %s26, 0
      %p60 = por %p58, %p59
      %s61 = ssub.s32 %s27, %s39
      %s62 = ssub.s32 %s28, %s35
      %s63 = sor.u32 %s61, %s62
      %p64 = scmp.eq.s32.totalorder %s63, 0
      %s66 = sadd.s32 %s65, 1
      %s67 = scalar_select %p64, %s65, %s66
      %p70 = pneg %p64
      %p71 = scmp.eq.s32.totalorder %s20, 1
      %p72 = por %p70, %p71
      %p73 = scmp.ne.s32.totalorder %s65, %s68
      %p74 = scmp.eq.s32.totalorder %s20, 0
      %p75 = por %p73, %p74
      %p76 = scmp.ne.s32.totalorder %s65, %s68
      %p77 = scmp.eq.s32.totalorder %s25, 1
      %p78 = por %p76, %p77
      %p79 = scmp.ne.s32.totalorder %s68, %s69
      %p80 = scmp.eq.s32.totalorder %s25, 0
      %p81 = por %p79, %p80
      %p82 = scmp.ne.s32.totalorder %s68, %s69
      %p83 = scmp.eq.s32.totalorder %s26, 1
      %p84 = por %p82, %p83
      %p86 = scmp.ne.s32.totalorder %s69, %s85
      %p87 = scmp.eq.s32.totalorder %s26, 0
      %p88 = por %p86, %p87
      %s89 = ssub.s32 %s27, %s39
      %s90 = ssub.s32 %s28, %s35
      %s91 = sor.u32 %s89, %s90
      %p92 = scmp.eq.s32.totalorder %s91, 0
      %s94 = sadd.s32 %s93, 1
      %s95 = scalar_select %p92, %s93, %s94
      %p98 = pneg %p92
      %p99 = scmp.eq.s32.totalorder %s20, 1
      %p100 = por %p98, %p99
      %p101 = scmp.ne.s32.totalorder %s93, %s96
      %p102 = scmp.eq.s32.totalorder %s20, 0
      %p103 = por %p101, %p102
      %p104 = scmp.ne.s32.totalorder %s93, %s96
      %p105 = scmp.eq.s32.totalorder %s25, 1
      %p106 = por %p104, %p105
      %p107 = scmp.ne.s32.totalorder %s96, %s97
      %p108 = scmp.eq.s32.totalorder %s25, 0
      %p109 = por %p107, %p108
      %p110 = scmp.ne.s32.totalorder %s96, %s97
      %p111 = scmp.eq.s32.totalorder %s26, 1
      %p112 = por %p110, %p111
      %p114 = scmp.ne.s32.totalorder %s97, %s113
      %p115 = scmp.eq.s32.totalorder %s26, 0
      %p116 = por %p114, %p115
      %s117 = ssub.s32 %s27, %s39
      %s118 = ssub.s32 %s28, %s35
      %s119 = sor.u32 %s117, %s118
      %p120 = scmp.eq.s32.totalorder %s119, 0
      %s122 = sadd.s32 %s121, 1
      %s123 = scalar_select %p120, %s121, %s122
      %p126 = pneg %p120
      %p127 = scmp.eq.s32.totalorder %s20, 1
      %p128 = por %p126, %p127
      %p129 = scmp.ne.s32.totalorder %s121, %s124
      %p130 = scmp.eq.s32.totalorder %s20, 0
      %p131 = por %p129, %p130
      %p132 = scmp.ne.s32.totalorder %s121, %s124
      %p133 = scmp.eq.s32.totalorder %s25, 1
      %p134 = por %p132, %p133
      %p135 = scmp.ne.s32.totalorder %s124, %s125
      %p136 = scmp.eq.s32.totalorder %s25, 0
      %p137 = por %p135, %p136
      %p138 = scmp.ne.s32.totalorder %s124, %s125
      %p139 = scmp.eq.s32.totalorder %s26, 1
      %p140 = por %p138, %p139
      %p142 = scmp.ne.s32.totalorder %s125, %s141
      %p143 = scmp.eq.s32.totalorder %s26, 0
      %p144 = por %p142, %p143
      %s145 = ssub.s32 %s27, %s39
      %s146 = ssub.s32 %s28, %s35
      %s147 = sor.u32 %s145, %s146
      %p148 = scmp.eq.s32.totalorder %s147, 0
      %s150 = sadd.s32 %s149, 1
      %s151 = scalar_select %p148, %s149, %s150
      %p154 = pneg %p148
      %p155 = scmp.eq.s32.totalorder %s20, 1
      %p156 = por %p154, %p155
      %p157 = scmp.ne.s32.totalorder %s149, %s152
      %p158 = scmp.eq.s32.totalorder %s20, 0
      %p159 = por %p157, %p158
      %p160 = scmp.ne.s32.totalorder %s149, %s152
      %p161 = scmp.eq.s32.totalorder %s25, 1
      %p162 = por %p160, %p161
      %p163 = scmp.ne.s32.totalorder %s152, %s153
      %p164 = scmp.eq.s32.totalorder %s25, 0
      %p165 = por %p163, %p164
      %p166 = scmp.ne.s32.totalorder %s152, %s153
      %p167 = scmp.eq.s32.totalorder %s26, 1
      %p168 = por %p166, %p167
      %p170 = scmp.ne.s32.totalorder %s153, %s169
      %p171 = scmp.eq.s32.totalorder %s26, 0
      %p172 = por %p170, %p171
      %s173 = ssub.s32 %s27, %s39
      %s174 = ssub.s32 %s28, %s35
      %s175 = sor.u32 %s173, %s174
      %p176 = scmp.eq.s32.totalorder %s175, 0
      %s178 = sadd.s32 %s177, 1
      %s179 = scalar_select %p176, %s177, %s178
      %p182 = pneg %p176
      %p183 = scmp.eq.s32.totalorder %s20, 1
      %p184 = por %p182, %p183
      %p185 = scmp.ne.s32.totalorder %s177, %s180
      %p186 = scmp.eq.s32.totalorder %s20, 0
      %p187 = por %p185, %p186
      %p188 = scmp.ne.s32.totalorder %s177, %s180
      %p189 = scmp.eq.s32.totalorder %s25, 1
      %p190 = por %p188, %p189
      %p191 = scmp.ne.s32.totalorder %s180, %s181
      %p192 = scmp.eq.s32.totalorder %s25, 0
      %p193 = por %p191, %p192
      %p194 = scmp.ne.s32.totalorder %s180, %s181
      %p195 = scmp.eq.s32.totalorder %s26, 1
      %p196 = por %p194, %p195
      %p198 = scmp.ne.s32.totalorder %s181, %s197
      %p199 = scmp.eq.s32.totalorder %s26, 0
      %p200 = por %p198, %p199
      %s201 = ssub.s32 %s27, %s39
      %s202 = ssub.s32 %s28, %s35
      %s203 = sor.u32 %s201, %s202
      %p204 = scmp.eq.s32.totalorder %s203, 0
      %s206 = sadd.s32 %s205, 1
      %s207 = scalar_select %p204, %s205, %s206
      %p210 = pneg %p204
      %p211 = scmp.eq.s32.totalorder %s20, 1
      %p212 = por %p210, %p211
      %p213 = scmp.ne.s32.totalorder %s205, %s208
      %p214 = scmp.eq.s32.totalorder %s20, 0
      %p215 = por %p213, %p214
      %p216 = scmp.ne.s32.totalorder %s205, %s208
      %p217 = scmp.eq.s32.totalorder %s25, 1
      %p218 = por %p216, %p217
      %p219 = scmp.ne.s32.totalorder %s208, %s209
      %p220 = scmp.eq.s32.totalorder %s25, 0
      %p221 = por %p219, %p220
      %p222 = scmp.ne.s32.totalorder %s208, %s209
      %p223 = scmp.eq.s32.totalorder %s26, 1
      %p224 = por %p222, %p223
      %p226 = scmp.ne.s32.totalorder %s209, %s225
      %p227 = scmp.eq.s32.totalorder %s26, 0
      %p228 = por %p226, %p227
      %s229 = ssub.s32 %s27, %s39
      %s230 = ssub.s32 %s28, %s35
      %s231 = sor.u32 %s229, %s230
      %p232 = scmp.eq.s32.totalorder %s231, 0
      %s234 = sadd.s32 %s233, 1
      %s235 = scalar_select %p232, %s233, %s234
      %p238 = pneg %p232
      %p239 = scmp.eq.s32.totalorder %s20, 1
      %p240 = por %p238, %p239
      %p241 = scmp.ne.s32.totalorder %s233, %s236
      %p242 = scmp.eq.s32.totalorder %s20, 0
      %p243 = por %p241, %p242
      %p244 = scmp.ne.s32.totalorder %s233, %s236
      %p245 = scmp.eq.s32.totalorder %s25, 1
      %p246 = por %p244, %p245
      %p247 = scmp.ne.s32.totalorder %s236, %s237
      %p248 = scmp.eq.s32.totalorder %s25, 0
      %p249 = por %p247, %p248
      %p250 = scmp.ne.s32.totalorder %s236, %s237
      %p251 = scmp.eq.s32.totalorder %s26, 1
      %p252 = por %p250, %p251
      %p254 = scmp.ne.s32.totalorder %s237, %s253
      %p255 = scmp.eq.s32.totalorder %s26, 0
      %p256 = por %p254, %p255
      %s257 = ssub.s32 %s27, %s39
      %s258 = ssub.s32 %s28, %s35
      %s259 = sor.u32 %s257, %s258
      %p260 = scmp.eq.s32.totalorder %s259, 0
      %s262 = sadd.s32 %s261, 1
      %s263 = scalar_select %p260, %s261, %s262
      %p266 = pneg %p260
      %p267 = scmp.eq.s32.totalorder %s20, 1
      %p268 = por %p266, %p267
      %p269 = scmp.ne.s32.totalorder %s261, %s264
      %p270 = scmp.eq.s32.totalorder %s20, 0
      %p271 = por %p269, %p270
      %p272 = scmp.ne.s32.totalorder %s261, %s264
      %p273 = scmp.eq.s32.totalorder %s25, 1
      %p274 = por %p272, %p273
      %p275 = scmp.ne.s32.totalorder %s264, %s265
      %p276 = scmp.eq.s32.totalorder %s25, 0
      %p277 = por %p275, %p276
      %p278 = scmp.ne.s32.totalorder %s264, %s265
      %p279 = scmp.eq.s32.totalorder %s26, 1
      %p280 = por %p278, %p279
      %p282 = scmp.ne.s32.totalorder %s265, %s281
      %p283 = scmp.eq.s32.totalorder %s26, 0
      %p284 = por %p282, %p283
      %s285 = ssub.s32 %s27, %s39
      %s286 = ssub.s32 %s28, %s35
      %s287 = sor.u32 %s285, %s286
      %p288 = scmp.eq.s32.totalorder %s287, 0
      %s290 = sadd.s32 %s289, 1
      %s291 = scalar_select %p288, %s289, %s290
      %p294 = pneg %p288
      %p295 = scmp.eq.s32.totalorder %s20, 1
      %p296 = por %p294, %p295
      %p297 = scmp.ne.s32.totalorder %s289, %s292
      %p298 = scmp.eq.s32.totalorder %s20, 0
      %p299 = por %p297, %p298
      %p300 = scmp.ne.s32.totalorder %s289, %s292
      %p301 = scmp.eq.s32.totalorder %s25, 1
      %p302 = por %p300, %p301
      %p303 = scmp.ne.s32.totalorder %s292, %s293
      %p304 = scmp.eq.s32.totalorder %s25, 0
      %p305 = por %p303, %p304
      %p306 = scmp.ne.s32.totalorder %s292, %s293
      %p307 = scmp.eq.s32.totalorder %s26, 1
      %p308 = por %p306, %p307
      %p310 = scmp.ne.s32.totalorder %s293, %s309
      %p311 = scmp.eq.s32.totalorder %s26, 0
      %p312 = por %p310, %p311
      %s313 = ssub.s32 %s27, %s39
      %s314 = ssub.s32 %s28, %s35
      %s315 = sor.u32 %s313, %s314
      %p316 = scmp.eq.s32.totalorder %s315, 0
      %s318 = sadd.s32 %s317, 1
      %s319 = scalar_select %p316, %s317, %s318
      %p322 = pneg %p316
      %p323 = scmp.eq.s32.totalorder %s20, 1
      %p324 = por %p322, %p323
      %p325 = scmp.ne.s32.totalorder %s317, %s320
      %p326 = scmp.eq.s32.totalorder %s20, 0
      %p327 = por %p325, %p326
      %p328 = scmp.ne.s32.totalorder %s317, %s320
      %p329 = scmp.eq.s32.totalorder %s25, 1
      %p330 = por %p328, %p329
      %p331 = scmp.ne.s32.totalorder %s320, %s321
      %p332 = scmp.eq.s32.totalorder %s25, 0
      %p333 = por %p331, %p332
      %p334 = scmp.ne.s32.totalorder %s320, %s321
      %p335 = scmp.eq.s32.totalorder %s26, 1
      %p336 = por %p334, %p335
      %p338 = scmp.ne.s32.totalorder %s321, %s337
      %p339 = scmp.eq.s32.totalorder %s26, 0
      %p340 = por %p338, %p339
      %s341 = ssub.s32 %s27, %s39
      %s342 = ssub.s32 %s28, %s35
      %s343 = sor.u32 %s341, %s342
      %p344 = scmp.eq.s32.totalorder %s343, 0
      %s346 = sadd.s32 %s345, 1
      %s347 = scalar_select %p344, %s345, %s346
      %p350 = pneg %p344
      %p351 = scmp.eq.s32.totalorder %s20, 1
      %p352 = por %p350, %p351
      %p353 = scmp.ne.s32.totalorder %s345, %s348
      %p354 = scmp.eq.s32.totalorder %s20, 0
      %p355 = por %p353, %p354
      %p356 = scmp.ne.s32.totalorder %s345, %s348
      %p357 = scmp.eq.s32.totalorder %s25, 1
      %p358 = por %p356, %p357
      %p359 = scmp.ne.s32.totalorder %s348, %s349
      %p360 = scmp.eq.s32.totalorder %s25, 0
      %p361 = por %p359, %p360
      %p362 = scmp.ne.s32.totalorder %s348, %s349
      %p363 = scmp.eq.s32.totalorder %s26, 1
      %p364 = por %p362, %p363
      %p366 = scmp.ne.s32.totalorder %s349, %s365
      %p367 = scmp.eq.s32.totalorder %s26, 0
      %p368 = por %p366, %p367
      %s369 = ssub.s32 %s27, %s39
      %s370 = ssub.s32 %s28, %s35
      %s371 = sor.u32 %s369, %s370
      %p372 = scmp.eq.s32.totalorder %s371, 0
      %s374 = sadd.s32 %s373, 1
      %s375 = scalar_select %p372, %s373, %s374
      %p378 = pneg %p372
      %p379 = scmp.eq.s32.totalorder %s20, 1
      %p380 = por %p378, %p379
      %p381 = scmp.ne.s32.totalorder %s373, %s376
      %p382 = scmp.eq.s32.totalorder %s20, 0
      %p383 = por %p381, %p382
      %p384 = scmp.ne.s32.totalorder %s373, %s376
      %p385 = scmp.eq.s32.totalorder %s25, 1
      %p386 = por %p384, %p385
      %p387 = scmp.ne.s32.totalorder %s376, %s377
      %p388 = scmp.eq.s32.totalorder %s25, 0
      %p389 = por %p387, %p388
      %p390 = scmp.ne.s32.totalorder %s376, %s377
      %p391 = scmp.eq.s32.totalorder %s26, 1
      %p392 = por %p390, %p391
      %p394 = scmp.ne.s32.totalorder %s377, %s393
      %p395 = scmp.eq.s32.totalorder %s26, 0
      %p396 = por %p394, %p395
      %p397 = scmp.le.s32.totalorder 1, %s20
      %p398 = scmp.lt.s32.totalorder %s20, 3
      %p399 = pnand %p397, %p398
      %p400 = pneg %p399
      // Predicated region
      $region9: #{datanet3d_forward.1} parent=5 // pred_check
        _
      $region10: #{datanet3d_forward.1} parent=5 // pred_check_branch
        %402 = sbr.rel (%p399) target = $region12
      $region11: #{datanet3d_forward.1} parent=5 // pred_region
        %s403 = ssub.s32 %s20, 1
        // Predicated region
        $region13: #{datanet3d_forward.1} parent=11 // pred_check
          %p404 = pneg %p53
        $region14: #{datanet3d_forward.1} parent=11 // pred_check_branch
          %406 = sbr.rel (%p404) target = $region16
        $region15: #{datanet3d_forward.1} parent=11 // pred_region
          %s408 = ssub.s32 16, 16
          %409 = vsyncadd [#allocation3], %s408
          %s411 = sshll.u32 %s0, 4
          %s412 = int_to_ptr.vmem [resolvable:$true] %s411
          %414 = dma.vmem_to_smem %s412, 16, [#allocation2], [#allocation3]
        $region16: #{datanet3d_forward.1} parent=11 // pred_fallthru
          _
      $region12: #{datanet3d_forward.1} parent=5 // pred_fallthru
        _
      %p415 = scmp.lt.s32.totalorder %s20, 2
      // Predicated region
      $region17: #{datanet3d_forward.1} parent=5 // pred_check
        %p416 = pneg %p415
      $region18: #{datanet3d_forward.1} parent=5 // pred_check_branch
        %418 = sbr.rel (%p416) target = $region20
      $region19: #{datanet3d_forward.1} parent=5 // pred_region
        // Predicated region
        $region21: #{datanet3d_forward.1} parent=19 // pred_check
          %p419 = pneg %p75
        $region22: #{datanet3d_forward.1} parent=19 // pred_check_branch
          %421 = sbr.rel (%p419) target = $region24
        $region23: #{datanet3d_forward.1} parent=19 // pred_region
          %s422 = smul.u32 2, %s28
          %p423 = scmp.lt.s32.totalorder %s27, 1
          %s424 = scalar_select %p423, %s27, 1
          %p425 = scmp.lt.s32.totalorder %s422, 1
          %s426 = scalar_select %p425, %s422, 1
          %s427 = smul.addr %s424, 8
          %s428 = sadd.s32 %s426, %s427
          %s429 = smul.addr %s428, 8
          %s430 = scalar_lea.vmem %s1, %s429
          %s431 = smul.u32 2, %s28
        $region24: #{datanet3d_forward.1} parent=19 // pred_fallthru
          _
        // Predicated region
        $region25: #{datanet3d_forward.1} parent=19 // pred_check
          %p432 = pneg %p103
        $region26: #{datanet3d_forward.1} parent=19 // pred_check_branch
          %434 = sbr.rel (%p432) target = $region28
        $region27: #{datanet3d_forward.1} parent=19 // pred_region
          %s435 = smul.u32 2, %s28
          %p436 = scmp.lt.s32.totalorder %s27, 1
          %s437 = scalar_select %p436, %s27, 1
          %p438 = scmp.lt.s32.totalorder %s435, 1
          %s439 = scalar_select %p438, %s435, 1
          %s440 = smul.addr %s437, 8
          %s441 = sadd.s32 %s439, %s440
          %s442 = smul.addr %s441, 8
          %s443 = scalar_lea.vmem %s2, %s442
          %s444 = smul.u32 2, %s28
        $region28: #{datanet3d_forward.1} parent=19 // pred_fallthru
          _
        // Predicated region
        $region29: #{datanet3d_forward.1} parent=19 // pred_check
          %p445 = pneg %p131
        $region30: #{datanet3d_forward.1} parent=19 // pred_check_branch
          %447 = sbr.rel (%p445) target = $region32
        $region31: #{datanet3d_forward.1} parent=19 // pred_region
          %s448 = smul.u32 2, %s28
          %p449 = scmp.lt.s32.totalorder %s27, 1
          %s450 = scalar_select %p449, %s27, 1
          %p451 = scmp.lt.s32.totalorder %s448, 1
          %s452 = scalar_select %p451, %s448, 1
          %s453 = smul.addr %s450, 8
          %s454 = sadd.s32 %s452, %s453
          %s455 = smul.addr %s454, 8
          %s456 = scalar_lea.vmem %s3, %s455
          %s457 = smul.u32 2, %s28
        $region32: #{datanet3d_forward.1} parent=19 // pred_fallthru
          _
        // Predicated region
        $region33: #{datanet3d_forward.1} parent=19 // pred_check
          %p458 = pneg %p159
        $region34: #{datanet3d_forward.1} parent=19 // pred_check_branch
          %460 = sbr.rel (%p458) target = $region36
        $region35: #{datanet3d_forward.1} parent=19 // pred_region
          %s461 = smul.u32 2, %s28
          %p462 = scmp.lt.s32.totalorder %s27, 1
          %s463 = scalar_select %p462, %s27, 1
          %p464 = scmp.lt.s32.totalorder %s461, 1
          %s465 = scalar_select %p464, %s461, 1
          %s466 = smul.addr %s463, 8
          %s467 = sadd.s32 %s465, %s466
          %s468 = smul.addr %s467, 8
          %s469 = scalar_lea.vmem %s4, %s468
          %s470 = smul.u32 2, %s28
        $region36: #{datanet3d_forward.1} parent=19 // pred_fallthru
          _
        // Predicated region
        $region37: #{datanet3d_forward.1} parent=19 // pred_check
          %p471 = pneg %p187
        $region38: #{datanet3d_forward.1} parent=19 // pred_check_branch
          %473 = sbr.rel (%p471) target = $region40
        $region39: #{datanet3d_forward.1} parent=19 // pred_region
          %s474 = smul.u32 2, %s28
          %p475 = scmp.lt.s32.totalorder %s27, 1
          %s476 = scalar_select %p475, %s27, 1
          %p477 = scmp.lt.s32.totalorder %s474, 1
          %s478 = scalar_select %p477, %s474, 1
          %s479 = smul.addr %s476, 8
          %s480 = sadd.s32 %s478, %s479
          %s481 = smul.addr %s480, 8
          %s482 = scalar_lea.vmem %s5, %s481
          %s483 = smul.u32 2, %s28
        $region40: #{datanet3d_forward.1} parent=19 // pred_fallthru
          _
        // Predicated region
        $region41: #{datanet3d_forward.1} parent=19 // pred_check
          %p484 = pneg %p215
        $region42: #{datanet3d_forward.1} parent=19 // pred_check_branch
          %486 = sbr.rel (%p484) target = $region44
        $region43: #{datanet3d_forward.1} parent=19 // pred_region
          %s487 = smul.u32 2, %s28
          %p488 = scmp.lt.s32.totalorder %s27, 1
          %s489 = scalar_select %p488, %s27, 1
          %p490 = scmp.lt.s32.totalorder %s487, 1
          %s491 = scalar_select %p490, %s487, 1
          %s492 = smul.addr %s489, 8
          %s493 = sadd.s32 %s491, %s492
          %s494 = smul.addr %s493, 8
          %s495 = scalar_lea.vmem %s6, %s494
          %s496 = smul.u32 2, %s28
        $region44: #{datanet3d_forward.1} parent=19 // pred_fallthru
          _
        // Predicated region
        $region45: #{datanet3d_forward.1} parent=19 // pred_check
          %p497 = pneg %p243
        $region46: #{datanet3d_forward.1} parent=19 // pred_check_branch
          %499 = sbr.rel (%p497) target = $region48
        $region47: #{datanet3d_forward.1} parent=19 // pred_region
          %s500 = smul.u32 2, %s28
          %p501 = scmp.lt.s32.totalorder %s27, 1
          %s502 = scalar_select %p501, %s27, 1
          %p503 = scmp.lt.s32.totalorder %s500, 1
          %s504 = scalar_select %p503, %s500, 1
          %s505 = smul.addr %s502, 8
          %s506 = sadd.s32 %s504, %s505
          %s507 = smul.addr %s506, 8
          %s508 = scalar_lea.vmem %s7, %s507
          %s509 = smul.u32 2, %s28
        $region48: #{datanet3d_forward.1} parent=19 // pred_fallthru
          _
        // Predicated region
        $region49: #{datanet3d_forward.1} parent=19 // pred_check
          %p510 = pneg %p271
        $region50: #{datanet3d_forward.1} parent=19 // pred_check_branch
          %512 = sbr.rel (%p510) target = $region52
        $region51: #{datanet3d_forward.1} parent=19 // pred_region
          %s513 = smul.u32 2, %s28
          %p514 = scmp.lt.s32.totalorder %s27, 1
          %s515 = scalar_select %p514, %s27, 1
          %p516 = scmp.lt.s32.totalorder %s513, 1
          %s517 = scalar_select %p516, %s513, 1
          %s518 = smul.addr %s515, 8
          %s519 = sadd.s32 %s517, %s518
          %s520 = smul.addr %s519, 8
          %s521 = scalar_lea.vmem %s8, %s520
          %s522 = smul.u32 2, %s28
        $region52: #{datanet3d_forward.1} parent=19 // pred_fallthru
          _
        // Predicated region
        $region53: #{datanet3d_forward.1} parent=19 // pred_check
          %p523 = pneg %p299
        $region54: #{datanet3d_forward.1} parent=19 // pred_check_branch
          %525 = sbr.rel (%p523) target = $region56
        $region55: #{datanet3d_forward.1} parent=19 // pred_region
          %s526 = smul.u32 2, %s28
          %p527 = scmp.lt.s32.totalorder %s27, 1
          %s528 = scalar_select %p527, %s27, 1
          %p529 = scmp.lt.s32.totalorder %s526, 1
          %s530 = scalar_select %p529, %s526, 1
          %s531 = smul.addr %s528, 2
          %s532 = sadd.s32 %s530, %s531
          %s533 = smul.addr %s532, 4
          %s534 = scalar_lea.vmem %s9, %s533
          %s535 = smul.u32 2, %s28
        $region56: #{datanet3d_forward.1} parent=19 // pred_fallthru
          _
        // Predicated region
        $region57: #{datanet3d_forward.1} parent=19 // pred_check
          %p536 = pneg %p327
        $region58: #{datanet3d_forward.1} parent=19 // pred_check_branch
          %538 = sbr.rel (%p536) target = $region60
        $region59: #{datanet3d_forward.1} parent=19 // pred_region
          %s539 = smul.u32 2, %s28
          %p540 = scmp.lt.s32.totalorder %s27, 1
          %s541 = scalar_select %p540, %s27, 1
          %p542 = scmp.lt.s32.totalorder %s539, 1
          %s543 = scalar_select %p542, %s539, 1
          %s544 = smul.addr %s541, 2
          %s545 = sadd.s32 %s543, %s544
          %s546 = smul.addr %s545, 4
          %s547 = scalar_lea.vmem %s10, %s546
          %s548 = smul.u32 2, %s28
        $region60: #{datanet3d_forward.1} parent=19 // pred_fallthru
          _
      $region20: #{datanet3d_forward.1} parent=5 // pred_fallthru
        _
      %p549 = scmp.le.s32.totalorder 1, %s20
      %p550 = scmp.lt.s32.totalorder %s20, 3
      %p551 = pnand %p549, %p550
      %p552 = pneg %p551
      // Predicated region
      $region61: #{datanet3d_forward.1} parent=5 // pred_check
        _
      $region62: #{datanet3d_forward.1} parent=5 // pred_check_branch
        %554 = sbr.rel (%p551) target = $region64
      $region63: #{datanet3d_forward.1} parent=5 // pred_region
        %s555 = ssub.s32 %s20, 1
        // Predicated region
        $region65: #{datanet3d_forward.1} parent=63 // pred_check
          %p556 = pneg %p53
        $region66: #{datanet3d_forward.1} parent=63 // pred_check_branch
          %558 = sbr.rel (%p556) target = $region68
        $region67: #{datanet3d_forward.1} parent=63 // pred_region
          %559 = dma.done [#allocation3], 16
        $region68: #{datanet3d_forward.1} parent=63 // pred_fallthru
          _
        %560 = sfence
        %p561 = pneg %p53
        %p562 = pneg %p50
        %s563 = smul.u32 2, %s30
        %p564 = scmp.lt.s32.totalorder %s29, 1
        %s565 = scalar_select %p564, %s29, 1
        %p566 = scmp.lt.s32.totalorder %s563, 1
        %s567 = scalar_select %p566, %s563, 1
        %s568 = smul.addr %s565, 8
        %s569 = sadd.s32 %s567, %s568
        %s570 = smul.addr %s569, 8
        %s571 = scalar_lea.vmem %s1, %s570
        %p572 = pneg %p81
        %p573 = pneg %p78
        %s574 = smul.u32 2, %s30
        %p575 = scmp.lt.s32.totalorder %s29, 1
        %s576 = scalar_select %p575, %s29, 1
        %p577 = scmp.lt.s32.totalorder %s574, 1
        %s578 = scalar_select %p577, %s574, 1
        %s579 = smul.addr %s576, 8
        %s580 = sadd.s32 %s578, %s579
        %s581 = smul.addr %s580, 8
        %s582 = scalar_lea.vmem %s2, %s581
        %p583 = pneg %p109
        %p584 = pneg %p106
        %s585 = smul.u32 2, %s30
        %p586 = scmp.lt.s32.totalorder %s29, 1
        %s587 = scalar_select %p586, %s29, 1
        %p588 = scmp.lt.s32.totalorder %s585, 1
        %s589 = scalar_select %p588, %s585, 1
        %s590 = smul.addr %s587, 8
        %s591 = sadd.s32 %s589, %s590
        %s592 = smul.addr %s591, 8
        %s593 = scalar_lea.vmem %s3, %s592
        %p594 = pneg %p137
        %p595 = pneg %p134
        %s596 = smul.u32 2, %s30
        %p597 = scmp.lt.s32.totalorder %s29, 1
        %s598 = scalar_select %p597, %s29, 1
        %p599 = scmp.lt.s32.totalorder %s596, 1
        %s600 = scalar_select %p599, %s596, 1
        %s601 = smul.addr %s598, 8
        %s602 = sadd.s32 %s600, %s601
        %s603 = smul.addr %s602, 8
        %s604 = scalar_lea.vmem %s4, %s603
        %p605 = pneg %p165
        %p606 = pneg %p162
        %s607 = smul.u32 2, %s30
        %p608 = scmp.lt.s32.totalorder %s29, 1
        %s609 = scalar_select %p608, %s29, 1
        %p610 = scmp.lt.s32.totalorder %s607, 1
        %s611 = scalar_select %p610, %s607, 1
        %s612 = smul.addr %s609, 8
        %s613 = sadd.s32 %s611, %s612
        %s614 = smul.addr %s613, 8
        %s615 = scalar_lea.vmem %s5, %s614
        %p616 = pneg %p193
        %p617 = pneg %p190
        %s618 = smul.u32 2, %s30
        %p619 = scmp.lt.s32.totalorder %s29, 1
        %s620 = scalar_select %p619, %s29, 1
        %p621 = scmp.lt.s32.totalorder %s618, 1
        %s622 = scalar_select %p621, %s618, 1
        %s623 = smul.addr %s620, 8
        %s624 = sadd.s32 %s622, %s623
        %s625 = smul.addr %s624, 8
        %s626 = scalar_lea.vmem %s6, %s625
        %p627 = pneg %p221
        %p628 = pneg %p218
        %s629 = smul.u32 2, %s30
        %p630 = scmp.lt.s32.totalorder %s29, 1
        %s631 = scalar_select %p630, %s29, 1
        %p632 = scmp.lt.s32.totalorder %s629, 1
        %s633 = scalar_select %p632, %s629, 1
        %s634 = smul.addr %s631, 8
        %s635 = sadd.s32 %s633, %s634
        %s636 = smul.addr %s635, 8
        %s637 = scalar_lea.vmem %s7, %s636
        %p638 = pneg %p249
        %p639 = pneg %p246
        %s640 = smul.u32 2, %s30
        %p641 = scmp.lt.s32.totalorder %s29, 1
        %s642 = scalar_select %p641, %s29, 1
        %p643 = scmp.lt.s32.totalorder %s640, 1
        %s644 = scalar_select %p643, %s640, 1
        %s645 = smul.addr %s642, 8
        %s646 = sadd.s32 %s644, %s645
        %s647 = smul.addr %s646, 8
        %s648 = scalar_lea.vmem %s8, %s647
        %p649 = pneg %p277
        %p650 = pneg %p274
        %s651 = smul.u32 2, %s30
        %p652 = scmp.lt.s32.totalorder %s29, 1
        %s653 = scalar_select %p652, %s29, 1
        %p654 = scmp.lt.s32.totalorder %s651, 1
        %s655 = scalar_select %p654, %s651, 1
        %s656 = smul.addr %s653, 2
        %s657 = sadd.s32 %s655, %s656
        %s658 = smul.addr %s657, 4
        %s659 = scalar_lea.vmem %s9, %s658
        %p660 = pneg %p305
        %p661 = pneg %p302
        %s662 = smul.u32 2, %s30
        %p663 = scmp.lt.s32.totalorder %s29, 1
        %s664 = scalar_select %p663, %s29, 1
        %p665 = scmp.lt.s32.totalorder %s662, 1
        %s666 = scalar_select %p665, %s662, 1
        %s667 = smul.addr %s664, 2
        %s668 = sadd.s32 %s666, %s667
        %s669 = smul.addr %s668, 4
        %s670 = scalar_lea.vmem %s10, %s669
        %p671 = pneg %p333
        %p672 = pneg %p330
        %p673 = pneg %p361
        %p674 = pneg %p358
        %s675 = smul.u32 2, %s30
        %p676 = scmp.lt.s32.totalorder %s29, 1
        %s677 = scalar_select %p676, %s29, 1
        %p678 = scmp.lt.s32.totalorder %s675, 1
        %s679 = scalar_select %p678, %s675, 1
        %s680 = smul.addr %s677, 8
        %s681 = sadd.s32 %s679, %s680
        %s682 = smul.addr %s681, 8
        %s683 = scalar_lea.vmem %s11, %s682
        %p684 = pneg %p389
        %p685 = pneg %p386
        %s686 = smul.u32 2, %s30
        %p687 = scmp.lt.s32.totalorder %s29, 1
        %s688 = scalar_select %p687, %s29, 1
        %p689 = scmp.lt.s32.totalorder %s686, 1
        %s690 = scalar_select %p689, %s686, 1
        %s691 = smul.addr %s688, 8
        %s692 = sadd.s32 %s690, %s691
        %s693 = smul.addr %s692, 8
        %s694 = scalar_lea.vmem %s12, %s693
        %s695 = smul.u32 2, %s30
        %p696 = scmp.lt.s32.totalorder %s29, 1
        %s697 = scalar_select %p696, %s29, 1
        %p698 = scmp.lt.s32.totalorder %s695, 1
        %s699 = scalar_select %p698, %s695, 1
        %s700 = smul.addr %s697, 8
        %s701 = sadd.s32 %s699, %s700
        %s702 = smul.addr %s701, 8
        %s703 = scalar_lea.vmem %s1, %s702
        %s704 = smul.u32 2, %s30
        %s705 = smul.u32 2, %s30
        %p706 = scmp.lt.s32.totalorder %s29, 1
        %s707 = scalar_select %p706, %s29, 1
        %p708 = scmp.lt.s32.totalorder %s705, 1
        %s709 = scalar_select %p708, %s705, 1
        %s710 = smul.addr %s707, 8
        %s711 = sadd.s32 %s709, %s710
        %s712 = smul.addr %s711, 8
        %s713 = scalar_lea.vmem %s2, %s712
        %s714 = smul.u32 2, %s30
        %s715 = smul.u32 2, %s30
        %p716 = scmp.lt.s32.totalorder %s29, 1
        %s717 = scalar_select %p716, %s29, 1
        %p718 = scmp.lt.s32.totalorder %s715, 1
        %s719 = scalar_select %p718, %s715, 1
        %s720 = smul.addr %s717, 8
        %s721 = sadd.s32 %s719, %s720
        %s722 = smul.addr %s721, 8
        %s723 = scalar_lea.vmem %s3, %s722
        %s724 = smul.u32 2, %s30
        %s725 = smul.u32 2, %s30
        %p726 = scmp.lt.s32.totalorder %s29, 1
        %s727 = scalar_select %p726, %s29, 1
        %p728 = scmp.lt.s32.totalorder %s725, 1
        %s729 = scalar_select %p728, %s725, 1
        %s730 = smul.addr %s727, 8
        %s731 = sadd.s32 %s729, %s730
        %s732 = smul.addr %s731, 8
        %s733 = scalar_lea.vmem %s4, %s732
        %s734 = smul.u32 2, %s30
        %s735 = smul.u32 2, %s30
        %p736 = scmp.lt.s32.totalorder %s29, 1
        %s737 = scalar_select %p736, %s29, 1
        %p738 = scmp.lt.s32.totalorder %s735, 1
        %s739 = scalar_select %p738, %s735, 1
        %s740 = smul.addr %s737, 8
        %s741 = sadd.s32 %s739, %s740
        %s742 = smul.addr %s741, 8
        %s743 = scalar_lea.vmem %s5, %s742
        %s744 = smul.u32 2, %s30
        %s745 = smul.u32 2, %s30
        %p746 = scmp.lt.s32.totalorder %s29, 1
        %s747 = scalar_select %p746, %s29, 1
        %p748 = scmp.lt.s32.totalorder %s745, 1
        %s749 = scalar_select %p748, %s745, 1
        %s750 = smul.addr %s747, 8
        %s751 = sadd.s32 %s749, %s750
        %s752 = smul.addr %s751, 8
        %s753 = scalar_lea.vmem %s6, %s752
        %s754 = smul.u32 2, %s30
        %s755 = smul.u32 2, %s30
        %p756 = scmp.lt.s32.totalorder %s29, 1
        %s757 = scalar_select %p756, %s29, 1
        %p758 = scmp.lt.s32.totalorder %s755, 1
        %s759 = scalar_select %p758, %s755, 1
        %s760 = smul.addr %s757, 8
        %s761 = sadd.s32 %s759, %s760
        %s762 = smul.addr %s761, 8
        %s763 = scalar_lea.vmem %s7, %s762
        %s764 = smul.u32 2, %s30
        %s765 = smul.u32 2, %s30
        %p766 = scmp.lt.s32.totalorder %s29, 1
        %s767 = scalar_select %p766, %s29, 1
        %p768 = scmp.lt.s32.totalorder %s765, 1
        %s769 = scalar_select %p768, %s765, 1
        %s770 = smul.addr %s767, 8
        %s771 = sadd.s32 %s769, %s770
        %s772 = smul.addr %s771, 8
        %s773 = scalar_lea.vmem %s8, %s772
        %s774 = smul.u32 2, %s30
        %s775 = smul.u32 2, %s30
        %p776 = scmp.lt.s32.totalorder %s29, 1
        %s777 = scalar_select %p776, %s29, 1
        %p778 = scmp.lt.s32.totalorder %s775, 1
        %s779 = scalar_select %p778, %s775, 1
        %s780 = smul.addr %s777, 2
        %s781 = sadd.s32 %s779, %s780
        %s782 = smul.addr %s781, 4
        %s783 = scalar_lea.vmem %s9, %s782
        %s784 = smul.u32 2, %s30
        %s785 = smul.u32 2, %s30
        %p786 = scmp.lt.s32.totalorder %s29, 1
        %s787 = scalar_select %p786, %s29, 1
        %p788 = scmp.lt.s32.totalorder %s785, 1
        %s789 = scalar_select %p788, %s785, 1
        %s790 = smul.addr %s787, 2
        %s791 = sadd.s32 %s789, %s790
        %s792 = smul.addr %s791, 4
        %s793 = scalar_lea.vmem %s10, %s792
        %s794 = smul.u32 2, %s30
        %s795 = smul.u32 2, %s30
        %p796 = scmp.lt.s32.totalorder %s29, 1
        %s797 = scalar_select %p796, %s29, 1
        %p798 = scmp.lt.s32.totalorder %s795, 1
        %s799 = scalar_select %p798, %s795, 1
        %s800 = smul.addr %s797, 8
        %s801 = sadd.s32 %s799, %s800
        %s802 = smul.addr %s801, 8
        %s803 = scalar_lea.vmem %s11, %s802
        %s804 = smul.u32 2, %s30
        %s805 = smul.u32 2, %s30
        %p806 = scmp.lt.s32.totalorder %s29, 1
        %s807 = scalar_select %p806, %s29, 1
        %p808 = scmp.lt.s32.totalorder %s805, 1
        %s809 = scalar_select %p808, %s805, 1
        %s810 = smul.addr %s807, 8
        %s811 = sadd.s32 %s809, %s810
        %s812 = smul.addr %s811, 8
        %s813 = scalar_lea.vmem %s12, %s812
        %s814 = smul.u32 2, %s30
        %s815 = sld [smem:[#allocation2 + %s29]]
        %v816 = vstv %s815
        %v817 = vrcp.pop %v816
        %s818 = vtos %v817
        %v819 = vld [vmem:[%s763] sm:$0xff]
        %v820 = vld [vmem:[%s763 + $0x8] sm:$0xff]
        %v821 = vld [vmem:[%s763 + $0x10] sm:$0xff]
        %v822 = vld [vmem:[%s763 + $0x18] sm:$0xff]
        %v823 = vld [vmem:[%s763 + $0x20] sm:$0xff]
        %v824 = vld [vmem:[%s763 + $0x28] sm:$0xff]
        %v825 = vld [vmem:[%s763 + $0x30] sm:$0xff]
        %v826 = vld [vmem:[%s763 + $0x38] sm:$0xff]
        %v827 = vld [vmem:[%s703] sm:$0xff]
        %v828 = vld [vmem:[%s703 + $0x8] sm:$0xff]
        %v829 = vld [vmem:[%s703 + $0x10] sm:$0xff]
        %v830 = vld [vmem:[%s703 + $0x18] sm:$0xff]
        %v831 = vld [vmem:[%s703 + $0x20] sm:$0xff]
        %v832 = vld [vmem:[%s703 + $0x28] sm:$0xff]
        %v833 = vld [vmem:[%s703 + $0x30] sm:$0xff]
        %v834 = vld [vmem:[%s703 + $0x38] sm:$0xff]
        %v835 = vstv %s815
        %v836 = vmul.f32 %v835, %v827
        %v837 = vmul.f32 %v835, %v828
        %v838 = vmul.f32 %v835, %v829
        %v839 = vmul.f32 %v835, %v830
        %v840 = vmul.f32 %v835, %v831
        %v841 = vmul.f32 %v835, %v832
        %v842 = vmul.f32 %v835, %v833
        %v843 = vmul.f32 %v835, %v834
        %v844 = vadd.f32 %v819, %v836
        %v845 = vadd.f32 %v820, %v837
        %v846 = vadd.f32 %v821, %v838
        %v847 = vadd.f32 %v822, %v839
        %v848 = vadd.f32 %v823, %v840
        %v849 = vadd.f32 %v824, %v841
        %v850 = vadd.f32 %v825, %v842
        %v851 = vadd.f32 %v826, %v843
        %v852 = vld [vmem:[%s773] sm:$0xff]
        %v853 = vld [vmem:[%s773 + $0x8] sm:$0xff]
        %v854 = vld [vmem:[%s773 + $0x10] sm:$0xff]
        %v855 = vld [vmem:[%s773 + $0x18] sm:$0xff]
        %v856 = vld [vmem:[%s773 + $0x20] sm:$0xff]
        %v857 = vld [vmem:[%s773 + $0x28] sm:$0xff]
        %v858 = vld [vmem:[%s773 + $0x30] sm:$0xff]
        %v859 = vld [vmem:[%s773 + $0x38] sm:$0xff]
        %v860 = vld [vmem:[%s713] sm:$0xff]
        %v861 = vld [vmem:[%s713 + $0x8] sm:$0xff]
        %v862 = vld [vmem:[%s713 + $0x10] sm:$0xff]
        %v863 = vld [vmem:[%s713 + $0x18] sm:$0xff]
        %v864 = vld [vmem:[%s713 + $0x20] sm:$0xff]
        %v865 = vld [vmem:[%s713 + $0x28] sm:$0xff]
        %v866 = vld [vmem:[%s713 + $0x30] sm:$0xff]
        %v867 = vld [vmem:[%s713 + $0x38] sm:$0xff]
        %v868 = vmul.f32 %v835, %v860
        %v869 = vmul.f32 %v835, %v861
        %v870 = vmul.f32 %v835, %v862
        %v871 = vmul.f32 %v835, %v863
        %v872 = vmul.f32 %v835, %v864
        %v873 = vmul.f32 %v835, %v865
        %v874 = vmul.f32 %v835, %v866
        %v875 = vmul.f32 %v835, %v867
        %v876 = vadd.f32 %v852, %v868
        %v877 = vadd.f32 %v853, %v869
        %v878 = vadd.f32 %v854, %v870
        %v879 = vadd.f32 %v855, %v871
        %v880 = vadd.f32 %v856, %v872
        %v881 = vadd.f32 %v857, %v873
        %v882 = vadd.f32 %v858, %v874
        %v883 = vadd.f32 %v859, %v875
        %v884 = vld [vmem:[%s723] sm:$0xff]
        %v885 = vld [vmem:[%s723 + $0x8] sm:$0xff]
        %v886 = vld [vmem:[%s723 + $0x10] sm:$0xff]
        %v887 = vld [vmem:[%s723 + $0x18] sm:$0xff]
        %v888 = vld [vmem:[%s723 + $0x20] sm:$0xff]
        %v889 = vld [vmem:[%s723 + $0x28] sm:$0xff]
        %v890 = vld [vmem:[%s723 + $0x30] sm:$0xff]
        %v891 = vld [vmem:[%s723 + $0x38] sm:$0xff]
        %v892 = vld [vmem:[%s733] sm:$0xff]
        %v893 = vld [vmem:[%s733 + $0x8] sm:$0xff]
        %v894 = vld [vmem:[%s733 + $0x10] sm:$0xff]
        %v895 = vld [vmem:[%s733 + $0x18] sm:$0xff]
        %v896 = vld [vmem:[%s733 + $0x20] sm:$0xff]
        %v897 = vld [vmem:[%s733 + $0x28] sm:$0xff]
        %v898 = vld [vmem:[%s733 + $0x30] sm:$0xff]
        %v899 = vld [vmem:[%s733 + $0x38] sm:$0xff]
        %v900 = vmul.f32 %v884, %v844
        %v901 = vmul.f32 %v885, %v845
        %v902 = vmul.f32 %v886, %v846
        %v903 = vmul.f32 %v887, %v847
        %v904 = vmul.f32 %v888, %v848
        %v905 = vmul.f32 %v889, %v849
        %v906 = vmul.f32 %v890, %v850
        %v907 = vmul.f32 %v891, %v851
        %v908 = vmul.f32 %v892, %v876
        %v909 = vmul.f32 %v893, %v877
        %v910 = vmul.f32 %v894, %v878
        %v911 = vmul.f32 %v895, %v879
        %v912 = vmul.f32 %v896, %v880
        %v913 = vmul.f32 %v897, %v881
        %v914 = vmul.f32 %v898, %v882
        %v915 = vmul.f32 %v899, %v883
        %v916 = vsub.f32 %v900, %v908
        %v917 = vsub.f32 %v901, %v909
        %v918 = vsub.f32 %v902, %v910
        %v919 = vsub.f32 %v903, %v911
        %v920 = vsub.f32 %v904, %v912
        %v921 = vsub.f32 %v905, %v913
        %v922 = vsub.f32 %v906, %v914
        %v923 = vsub.f32 %v907, %v915
        %v924 = vmul.f32 %v884, %v876
        %v925 = vmul.f32 %v885, %v877
        %v926 = vmul.f32 %v886, %v878
        %v927 = vmul.f32 %v887, %v879
        %v928 = vmul.f32 %v888, %v880
        %v929 = vmul.f32 %v889, %v881
        %v930 = vmul.f32 %v890, %v882
        %v931 = vmul.f32 %v891, %v883
        %v932 = vmul.f32 %v892, %v844
        %v933 = vmul.f32 %v893, %v845
        %v934 = vmul.f32 %v894, %v846
        %v935 = vmul.f32 %v895, %v847
        %v936 = vmul.f32 %v896, %v848
        %v937 = vmul.f32 %v897, %v849
        %v938 = vmul.f32 %v898, %v850
        %v939 = vmul.f32 %v899, %v851
        %v940 = vadd.f32 %v924, %v932
        %v941 = vadd.f32 %v925, %v933
        %v942 = vadd.f32 %v926, %v934
        %v943 = vadd.f32 %v927, %v935
        %v944 = vadd.f32 %v928, %v936
        %v945 = vadd.f32 %v929, %v937
        %v946 = vadd.f32 %v930, %v938
        %v947 = vadd.f32 %v931, %v939
        %v948 = vrot.slane %v916, 4
        %v949 = vadd.f32 %v916, %v948
        %v950 = vrot.slane %v949, 2
        %v951 = vadd.f32 %v949, %v950
        %v952 = vrot.slane %v951, 1
        %v953 = vadd.f32 %v951, %v952
        %v954 = vrot.slane %v917, 4
        %v955 = vadd.f32 %v917, %v954
        %v956 = vrot.slane %v955, 2
        %v957 = vadd.f32 %v955, %v956
        %v958 = vrot.slane %v957, 1
        %v959 = vadd.f32 %v957, %v958
        %v960 = vrot.slane %v918, 4
        %v961 = vadd.f32 %v918, %v960
        %v962 = vrot.slane %v961, 2
        %v963 = vadd.f32 %v961, %v962
        %v964 = vrot.slane %v963, 1
        %v965 = vadd.f32 %v963, %v964
        %v966 = vrot.slane %v919, 4
        %v967 = vadd.f32 %v919, %v966
        %v968 = vrot.slane %v967, 2
        %v969 = vadd.f32 %v967, %v968
        %v970 = vrot.slane %v969, 1
        %v971 = vadd.f32 %v969, %v970
        %v972 = vrot.slane %v920, 4
        %v973 = vadd.f32 %v920, %v972
        %v974 = vrot.slane %v973, 2
        %v975 = vadd.f32 %v973, %v974
        %v976 = vrot.slane %v975, 1
        %v977 = vadd.f32 %v975, %v976
        %v978 = vrot.slane %v921, 4
        %v979 = vadd.f32 %v921, %v978
        %v980 = vrot.slane %v979, 2
        %v981 = vadd.f32 %v979, %v980
        %v982 = vrot.slane %v981, 1
        %v983 = vadd.f32 %v981, %v982
        %v984 = vrot.slane %v922, 4
        %v985 = vadd.f32 %v922, %v984
        %v986 = vrot.slane %v985, 2
        %v987 = vadd.f32 %v985, %v986
        %v988 = vrot.slane %v987, 1
        %v989 = vadd.f32 %v987, %v988
        %v990 = vrot.slane %v923, 4
        %v991 = vadd.f32 %v923, %v990
        %v992 = vrot.slane %v991, 2
        %v993 = vadd.f32 %v991, %v992
        %v994 = vrot.slane %v993, 1
        %v995 = vadd.f32 %v993, %v994
        %v996 = vrot.slane %v940, 4
        %v997 = vadd.f32 %v940, %v996
        %v998 = vrot.slane %v997, 2
        %v999 = vadd.f32 %v997, %v998
        %v1000 = vrot.slane %v999, 1
        %v1001 = vadd.f32 %v999, %v1000
        %v1002 = vrot.slane %v941, 4
        %v1003 = vadd.f32 %v941, %v1002
        %v1004 = vrot.slane %v1003, 2
        %v1005 = vadd.f32 %v1003, %v1004
        %v1006 = vrot.slane %v1005, 1
        %v1007 = vadd.f32 %v1005, %v1006
        %v1008 = vrot.slane %v942, 4
        %v1009 = vadd.f32 %v942, %v1008
        %v1010 = vrot.slane %v1009, 2
        %v1011 = vadd.f32 %v1009, %v1010
        %v1012 = vrot.slane %v1011, 1
        %v1013 = vadd.f32 %v1011, %v1012
        %v1014 = vrot.slane %v943, 4
        %v1015 = vadd.f32 %v943, %v1014
        %v1016 = vrot.slane %v1015, 2
        %v1017 = vadd.f32 %v1015, %v1016
        %v1018 = vrot.slane %v1017, 1
        %v1019 = vadd.f32 %v1017, %v1018
        %v1020 = vrot.slane %v944, 4
        %v1021 = vadd.f32 %v944, %v1020
        %v1022 = vrot.slane %v1021, 2
        %v1023 = vadd.f32 %v1021, %v1022
        %v1024 = vrot.slane %v1023, 1
        %v1025 = vadd.f32 %v1023, %v1024
        %v1026 = vrot.slane %v945, 4
        %v1027 = vadd.f32 %v945, %v1026
        %v1028 = vrot.slane %v1027, 2
        %v1029 = vadd.f32 %v1027, %v1028
        %v1030 = vrot.slane %v1029, 1
        %v1031 = vadd.f32 %v1029, %v1030
        %v1032 = vrot.slane %v946, 4
        %v1033 = vadd.f32 %v946, %v1032
        %v1034 = vrot.slane %v1033, 2
        %v1035 = vadd.f32 %v1033, %v1034
        %v1036 = vrot.slane %v1035, 1
        %v1037 = vadd.f32 %v1035, %v1036
        %v1038 = vrot.slane %v947, 4
        %v1039 = vadd.f32 %v947, %v1038
        %v1040 = vrot.slane %v1039, 2
        %v1041 = vadd.f32 %v1039, %v1040
        %v1042 = vrot.slane %v1041, 1
        %v1043 = vadd.f32 %v1041, %v1042
        %v1044 = vld [vmem:[%s783] sm:$0xff]
        %s1045 = smul.f32 %s815, 8.0
        %v1046 = vstv %s1045
        %v1047 = vadd.f32 %v1044, %v1046
        %v1048 = vld [vmem:[%s793] sm:$0xff]
        %v1049 = vmul.f32 %v1047, %v1047
        %v1050 = vmul.f32 %v1048, %v1048
        %v1051 = vadd.f32 %v1049, %v1050
        %v1052 = vrcp.pop %v1051
        %v1053 = vmul.f32 1.0, %v1052
        %v1055 = vcombine.high %v1047, %v1047
        %v1056 = vrot.slane %v1047, 1
        %v1057 = vrot.slane %v1055, 1
        %v1058 = vrot.slane %v1047, 2
        %v1059 = vrot.slane %v1055, 2
        %v1060 = vrot.slane %v1047, 3
        %v1061 = vrot.slane %v1055, 3
        %v1070 = vmul.f32 %v953, %v1047
        %v1071 = vmul.f32 %v959, %v1055
        %v1072 = vmul.f32 %v965, %v1056
        %v1073 = vmul.f32 %v971, %v1057
        %v1074 = vmul.f32 %v977, %v1058
        %v1075 = vmul.f32 %v983, %v1059
        %v1076 = vmul.f32 %v989, %v1060
        %v1077 = vmul.f32 %v995, %v1061
        %v1079 = vcombine.high %v1048, %v1048
        %v1080 = vrot.slane %v1048, 1
        %v1081 = vrot.slane %v1079, 1
        %v1082 = vrot.slane %v1048, 2
        %v1083 = vrot.slane %v1079, 2
        %v1084 = vrot.slane %v1048, 3
        %v1085 = vrot.slane %v1079, 3
        %v1094 = vmul.f32 %v1001, %v1048
        %v1095 = vmul.f32 %v1007, %v1079
        %v1096 = vmul.f32 %v1013, %v1080
        %v1097 = vmul.f32 %v1019, %v1081
        %v1098 = vmul.f32 %v1025, %v1082
        %v1099 = vmul.f32 %v1031, %v1083
        %v1100 = vmul.f32 %v1037, %v1084
        %v1101 = vmul.f32 %v1043, %v1085
        %v1102 = vadd.f32 %v1070, %v1094
        %v1103 = vadd.f32 %v1071, %v1095
        %v1104 = vadd.f32 %v1072, %v1096
        %v1105 = vadd.f32 %v1073, %v1097
        %v1106 = vadd.f32 %v1074, %v1098
        %v1107 = vadd.f32 %v1075, %v1099
        %v1108 = vadd.f32 %v1076, %v1100
        %v1109 = vadd.f32 %v1077, %v1101
        %v1111 = vcombine.high %v1053, %v1053
        %v1112 = vrot.slane %v1053, 1
        %v1113 = vrot.slane %v1111, 1
        %v1114 = vrot.slane %v1053, 2
        %v1115 = vrot.slane %v1111, 2
        %v1116 = vrot.slane %v1053, 3
        %v1117 = vrot.slane %v1111, 3
        %v1126 = vmul.f32 %v1102, %v1053
        %v1127 = vmul.f32 %v1103, %v1111
        %v1128 = vmul.f32 %v1104, %v1112
        %v1129 = vmul.f32 %v1105, %v1113
        %v1130 = vmul.f32 %v1106, %v1114
        %v1131 = vmul.f32 %v1107, %v1115
        %v1132 = vmul.f32 %v1108, %v1116
        %v1133 = vmul.f32 %v1109, %v1117
        %v1134 = vmul.f32 %v1001, %v1047
        %v1135 = vmul.f32 %v1007, %v1055
        %v1136 = vmul.f32 %v1013, %v1056
        %v1137 = vmul.f32 %v1019, %v1057
        %v1138 = vmul.f32 %v1025, %v1058
        %v1139 = vmul.f32 %v1031, %v1059
        %v1140 = vmul.f32 %v1037, %v1060
        %v1141 = vmul.f32 %v1043, %v1061
        %v1142 = vmul.f32 %v953, %v1048
        %v1143 = vmul.f32 %v959, %v1079
        %v1144 = vmul.f32 %v965, %v1080
        %v1145 = vmul.f32 %v971, %v1081
        %v1146 = vmul.f32 %v977, %v1082
        %v1147 = vmul.f32 %v983, %v1083
        %v1148 = vmul.f32 %v989, %v1084
        %v1149 = vmul.f32 %v995, %v1085
        %v1150 = vsub.f32 %v1134, %v1142
        %v1151 = vsub.f32 %v1135, %v1143
        %v1152 = vsub.f32 %v1136, %v1144
        %v1153 = vsub.f32 %v1137, %v1145
        %v1154 = vsub.f32 %v1138, %v1146
        %v1155 = vsub.f32 %v1139, %v1147
        %v1156 = vsub.f32 %v1140, %v1148
        %v1157 = vsub.f32 %v1141, %v1149
        %v1158 = vmul.f32 %v1150, %v1053
        %v1159 = vmul.f32 %v1151, %v1111
        %v1160 = vmul.f32 %v1152, %v1112
        %v1161 = vmul.f32 %v1153, %v1113
        %v1162 = vmul.f32 %v1154, %v1114
        %v1163 = vmul.f32 %v1155, %v1115
        %v1164 = vmul.f32 %v1156, %v1116
        %v1165 = vmul.f32 %v1157, %v1117
        %v1166 = vld [vmem:[%s743] sm:$0xff]
        %v1167 = vld [vmem:[%s743 + $0x8] sm:$0xff]
        %v1168 = vld [vmem:[%s743 + $0x10] sm:$0xff]
        %v1169 = vld [vmem:[%s743 + $0x18] sm:$0xff]
        %v1170 = vld [vmem:[%s743 + $0x20] sm:$0xff]
        %v1171 = vld [vmem:[%s743 + $0x28] sm:$0xff]
        %v1172 = vld [vmem:[%s743 + $0x30] sm:$0xff]
        %v1173 = vld [vmem:[%s743 + $0x38] sm:$0xff]
        %v1174 = vld [vmem:[%s753] sm:$0xff]
        %v1175 = vld [vmem:[%s753 + $0x8] sm:$0xff]
        %v1176 = vld [vmem:[%s753 + $0x10] sm:$0xff]
        %v1177 = vld [vmem:[%s753 + $0x18] sm:$0xff]
        %v1178 = vld [vmem:[%s753 + $0x20] sm:$0xff]
        %v1179 = vld [vmem:[%s753 + $0x28] sm:$0xff]
        %v1180 = vld [vmem:[%s753 + $0x30] sm:$0xff]
        %v1181 = vld [vmem:[%s753 + $0x38] sm:$0xff]
        %v1182 = vlaneseq
        %v1183 = vshrl.u32 %v1182, 7
        %v1184 = vsub.s32 0, %v1183
        %v1185 = vrot.slane %v1126, %v1184
        %v1186 = vlaneseq
        %v1187 = vshrl.u32 %v1186, 7
        %v1188 = vsub.s32 0, %v1187
        %v1189 = vrot.slane %v1127, %v1188
        %v1190 = vlaneseq
        %v1191 = vshrl.u32 %v1190, 7
        %v1192 = vsub.s32 0, %v1191
        %v1193 = vrot.slane %v1128, %v1192
        %v1194 = vlaneseq
        %v1195 = vshrl.u32 %v1194, 7
        %v1196 = vsub.s32 0, %v1195
        %v1197 = vrot.slane %v1129, %v1196
        %v1198 = vlaneseq
        %v1199 = vshrl.u32 %v1198, 7
        %v1200 = vsub.s32 0, %v1199
        %v1201 = vrot.slane %v1130, %v1200
        %v1202 = vlaneseq
        %v1203 = vshrl.u32 %v1202, 7
        %v1204 = vsub.s32 0, %v1203
        %v1205 = vrot.slane %v1131, %v1204
        %v1206 = vlaneseq
        %v1207 = vshrl.u32 %v1206, 7
        %v1208 = vsub.s32 0, %v1207
        %v1209 = vrot.slane %v1132, %v1208
        %v1210 = vlaneseq
        %v1211 = vshrl.u32 %v1210, 7
        %v1212 = vsub.s32 0, %v1211
        %v1213 = vrot.slane %v1133, %v1212
        %v1214 = vmul.f32 %v1166, %v1185
        %v1215 = vmul.f32 %v1167, %v1189
        %v1216 = vmul.f32 %v1168, %v1193
        %v1217 = vmul.f32 %v1169, %v1197
        %v1218 = vmul.f32 %v1170, %v1201
        %v1219 = vmul.f32 %v1171, %v1205
        %v1220 = vmul.f32 %v1172, %v1209
        %v1221 = vmul.f32 %v1173, %v1213
        %v1222 = vlaneseq
        %v1223 = vshrl.u32 %v1222, 7
        %v1224 = vsub.s32 0, %v1223
        %v1225 = vrot.slane %v1158, %v1224
        %v1226 = vlaneseq
        %v1227 = vshrl.u32 %v1226, 7
        %v1228 = vsub.s32 0, %v1227
        %v1229 = vrot.slane %v1159, %v1228
        %v1230 = vlaneseq
        %v1231 = vshrl.u32 %v1230, 7
        %v1232 = vsub.s32 0, %v1231
        %v1233 = vrot.slane %v1160, %v1232
        %v1234 = vlaneseq
        %v1235 = vshrl.u32 %v1234, 7
        %v1236 = vsub.s32 0, %v1235
        %v1237 = vrot.slane %v1161, %v1236
        %v1238 = vlaneseq
        %v1239 = vshrl.u32 %v1238, 7
        %v1240 = vsub.s32 0, %v1239
        %v1241 = vrot.slane %v1162, %v1240
        %v1242 = vlaneseq
        %v1243 = vshrl.u32 %v1242, 7
        %v1244 = vsub.s32 0, %v1243
        %v1245 = vrot.slane %v1163, %v1244
        %v1246 = vlaneseq
        %v1247 = vshrl.u32 %v1246, 7
        %v1248 = vsub.s32 0, %v1247
        %v1249 = vrot.slane %v1164, %v1248
        %v1250 = vlaneseq
        %v1251 = vshrl.u32 %v1250, 7
        %v1252 = vsub.s32 0, %v1251
        %v1253 = vrot.slane %v1165, %v1252
        %v1254 = vmul.f32 %v1174, %v1225
        %v1255 = vmul.f32 %v1175, %v1229
        %v1256 = vmul.f32 %v1176, %v1233
        %v1257 = vmul.f32 %v1177, %v1237
        %v1258 = vmul.f32 %v1178, %v1241
        %v1259 = vmul.f32 %v1179, %v1245
        %v1260 = vmul.f32 %v1180, %v1249
        %v1261 = vmul.f32 %v1181, %v1253
        %v1262 = vsub.f32 %v1214, %v1254
        %v1263 = vsub.f32 %v1215, %v1255
        %v1264 = vsub.f32 %v1216, %v1256
        %v1265 = vsub.f32 %v1217, %v1257
        %v1266 = vsub.f32 %v1218, %v1258
        %v1267 = vsub.f32 %v1219, %v1259
        %v1268 = vsub.f32 %v1220, %v1260
        %v1269 = vsub.f32 %v1221, %v1261
        %v1270 = vmul.f32 %v1166, %v1225
        %v1271 = vmul.f32 %v1167, %v1229
        %v1272 = vmul.f32 %v1168, %v1233
        %v1273 = vmul.f32 %v1169, %v1237
        %v1274 = vmul.f32 %v1170, %v1241
        %v1275 = vmul.f32 %v1171, %v1245
        %v1276 = vmul.f32 %v1172, %v1249
        %v1277 = vmul.f32 %v1173, %v1253
        %v1278 = vmul.f32 %v1174, %v1185
        %v1279 = vmul.f32 %v1175, %v1189
        %v1280 = vmul.f32 %v1176, %v1193
        %v1281 = vmul.f32 %v1177, %v1197
        %v1282 = vmul.f32 %v1178, %v1201
        %v1283 = vmul.f32 %v1179, %v1205
        %v1284 = vmul.f32 %v1180, %v1209
        %v1285 = vmul.f32 %v1181, %v1213
        %v1286 = vadd.f32 %v1270, %v1278
        %v1287 = vadd.f32 %v1271, %v1279
        %v1288 = vadd.f32 %v1272, %v1280
        %v1289 = vadd.f32 %v1273, %v1281
        %v1290 = vadd.f32 %v1274, %v1282
        %v1291 = vadd.f32 %v1275, %v1283
        %v1292 = vadd.f32 %v1276, %v1284
        %v1293 = vadd.f32 %v1277, %v1285
        %v1294 = vsub.f32 %v844, %v1262
        %v1295 = vsub.f32 %v845, %v1263
        %v1296 = vsub.f32 %v846, %v1264
        %v1297 = vsub.f32 %v847, %v1265
        %v1298 = vsub.f32 %v848, %v1266
        %v1299 = vsub.f32 %v849, %v1267
        %v1300 = vsub.f32 %v850, %v1268
        %v1301 = vsub.f32 %v851, %v1269
        %v1302 = vstv %s818
        %v1303 = vmul.f32 %v1294, %v1302
        %v1304 = vmul.f32 %v1295, %v1302
        %v1305 = vmul.f32 %v1296, %v1302
        %v1306 = vmul.f32 %v1297, %v1302
        %v1307 = vmul.f32 %v1298, %v1302
        %v1308 = vmul.f32 %v1299, %v1302
        %v1309 = vmul.f32 %v1300, %v1302
        %v1310 = vmul.f32 %v1301, %v1302
        %1311 = vst [vmem:[%s803] sm:$0xff] %v1303
        %1312 = vst [vmem:[%s803 + $0x8] sm:$0xff] %v1304
        %1313 = vst [vmem:[%s803 + $0x10] sm:$0xff] %v1305
        %1314 = vst [vmem:[%s803 + $0x18] sm:$0xff] %v1306
        %1315 = vst [vmem:[%s803 + $0x20] sm:$0xff] %v1307
        %1316 = vst [vmem:[%s803 + $0x28] sm:$0xff] %v1308
        %1317 = vst [vmem:[%s803 + $0x30] sm:$0xff] %v1309
        %1318 = vst [vmem:[%s803 + $0x38] sm:$0xff] %v1310
        %v1319 = vsub.f32 %v876, %v1286
        %v1320 = vsub.f32 %v877, %v1287
        %v1321 = vsub.f32 %v878, %v1288
        %v1322 = vsub.f32 %v879, %v1289
        %v1323 = vsub.f32 %v880, %v1290
        %v1324 = vsub.f32 %v881, %v1291
        %v1325 = vsub.f32 %v882, %v1292
        %v1326 = vsub.f32 %v883, %v1293
        %v1327 = vmul.f32 %v1319, %v1302
        %v1328 = vmul.f32 %v1320, %v1302
        %v1329 = vmul.f32 %v1321, %v1302
        %v1330 = vmul.f32 %v1322, %v1302
        %v1331 = vmul.f32 %v1323, %v1302
        %v1332 = vmul.f32 %v1324, %v1302
        %v1333 = vmul.f32 %v1325, %v1302
        %v1334 = vmul.f32 %v1326, %v1302
        %1335 = vst [vmem:[%s813] sm:$0xff] %v1327
        %1336 = vst [vmem:[%s813 + $0x8] sm:$0xff] %v1328
        %1337 = vst [vmem:[%s813 + $0x10] sm:$0xff] %v1329
        %1338 = vst [vmem:[%s813 + $0x18] sm:$0xff] %v1330
        %1339 = vst [vmem:[%s813 + $0x20] sm:$0xff] %v1331
        %1340 = vst [vmem:[%s813 + $0x28] sm:$0xff] %v1332
        %1341 = vst [vmem:[%s813 + $0x30] sm:$0xff] %v1333
        %1342 = vst [vmem:[%s813 + $0x38] sm:$0xff] %v1334
        %s1343 = smul.u32 2, %s30
        %p1344 = scmp.lt.s32.totalorder %s29, 1
        %s1345 = scalar_select %p1344, %s29, 1
        %p1346 = scmp.lt.s32.totalorder %s1343, 1
        %s1347 = scalar_select %p1346, %s1343, 1
        %s1348 = smul.addr %s1345, 8
        %s1349 = sadd.s32 %s1347, %s1348
        %s1350 = smul.addr %s1349, 8
        %s1351 = scalar_lea.vmem %s11, %s1350
        %s1352 = smul.u32 2, %s30
        %p1353 = scmp.lt.s32.totalorder %s29, 1
        %s1354 = scalar_select %p1353, %s29, 1
        %p1355 = scmp.lt.s32.totalorder %s1352, 1
        %s1356 = scalar_select %p1355, %s1352, 1
        %s1357 = smul.addr %s1354, 8
        %s1358 = sadd.s32 %s1356, %s1357
        %s1359 = smul.addr %s1358, 8
        %s1360 = scalar_lea.vmem %s12, %s1359
        // Predicated region
        $region69: #{datanet3d_forward.1} parent=63 // pred_check
          %p1361 = pneg %p358
        $region70: #{datanet3d_forward.1} parent=63 // pred_check_branch
          %1363 = sbr.rel (%p1361) target = $region72
        $region71: #{datanet3d_forward.1} parent=63 // pred_region
          %s1364 = smul.u32 2, %s30
        $region72: #{datanet3d_forward.1} parent=63 // pred_fallthru
          _
        // Predicated region
        $region73: #{datanet3d_forward.1} parent=63 // pred_check
          %p1365 = pneg %p386
        $region74: #{datanet3d_forward.1} parent=63 // pred_check_branch
          %1367 = sbr.rel (%p1365) target = $region76
        $region75: #{datanet3d_forward.1} parent=63 // pred_region
          %s1368 = smul.u32 2, %s30
        $region76: #{datanet3d_forward.1} parent=63 // pred_fallthru
          _
      $region64: #{datanet3d_forward.1} parent=5 // pred_fallthru
        _
      %p1369 = scmp.le.s32.totalorder 2, %s20
      // Predicated region
      $region77: #{datanet3d_forward.1} parent=5 // pred_check
        %p1370 = pneg %p1369
      $region78: #{datanet3d_forward.1} parent=5 // pred_check_branch
        %1372 = sbr.rel (%p1370) target = $region80
      $region79: #{datanet3d_forward.1} parent=5 // pred_region
        %s1373 = ssub.s32 %s20, 2
        // Predicated region
        $region81: #{datanet3d_forward.1} parent=79 // pred_check
          %p1374 = pneg %p364
        $region82: #{datanet3d_forward.1} parent=79 // pred_check_branch
          %1376 = sbr.rel (%p1374) target = $region84
        $region83: #{datanet3d_forward.1} parent=79 // pred_region
          %s1377 = smul.u32 2, %s32
          %p1378 = scmp.lt.s32.totalorder %s31, 1
          %s1379 = scalar_select %p1378, %s31, 1
          %p1380 = scmp.lt.s32.totalorder %s1377, 1
          %s1381 = scalar_select %p1380, %s1377, 1
          %s1382 = smul.addr %s1379, 8
          %s1383 = sadd.s32 %s1381, %s1382
          %s1384 = smul.addr %s1383, 8
          %s1385 = scalar_lea.vmem %s11, %s1384
        $region84: #{datanet3d_forward.1} parent=79 // pred_fallthru
          _
        // Predicated region
        $region85: #{datanet3d_forward.1} parent=79 // pred_check
          %p1386 = pneg %p392
        $region86: #{datanet3d_forward.1} parent=79 // pred_check_branch
          %1388 = sbr.rel (%p1386) target = $region88
        $region87: #{datanet3d_forward.1} parent=79 // pred_region
          %s1389 = smul.u32 2, %s32
          %p1390 = scmp.lt.s32.totalorder %s31, 1
          %s1391 = scalar_select %p1390, %s31, 1
          %p1392 = scmp.lt.s32.totalorder %s1389, 1
          %s1393 = scalar_select %p1392, %s1389, 1
          %s1394 = smul.addr %s1391, 8
          %s1395 = sadd.s32 %s1393, %s1394
          %s1396 = smul.addr %s1395, 8
          %s1397 = scalar_lea.vmem %s12, %s1396
        $region88: #{datanet3d_forward.1} parent=79 // pred_fallthru
          _
      $region80: #{datanet3d_forward.1} parent=5 // pred_fallthru
        _
    $region6: #{datanet3d_forward.1} parent=1 // loop_footer
      %s24 = sadd.s32 1, %s20
    $region7: #{datanet3d_forward.1} parent=1 // loop_footer_branch
      %19 = sbr.rel target = $region3
    $region8: #{datanet3d_forward.1} parent=1 // loop_exit
      _
    %1398 = vsyncpa [#allocation3], 1
    %s1399 = scalar_lea.sflag [#allocation3], 1
    %1400 = vsyncpa %s1399, 1

</llo_original>
